<compile_context>
chip_gen: v6e
topology: v6e:2x2x1
jax: 0.10.0
libtpu: 0.0.40
codegen_flags: <defaults>
</compile_context>

<pallas_src>
import jax
import jax.numpy as jnp
from jax import lax
from jax.experimental import pallas as pl
from jax.experimental.pallas import tpu as pltpu

IN_FEATURES = 32 * 32 * 3   # 3072
HIDDEN = 90
OUT = 10
HIDDEN_PAD = 128            # lane-dense hidden width
OUT_PAD = 128               # lane-dense output width (sliced back to 10 in the wrapper)


def _round_up(n, m):
    return ((n + m - 1) // m) * m


def mlp_kernel(x_ref, w1_ref, b1_ref, w2_ref, b2_ref, o_ref):
    # x_ref:  (TB, 3072) bf16        w1_ref: (3072, 128) bf16   b1_ref: (1, 128) f32
    # w2_ref: (128, 128) f32         b2_ref: (1, 128) f32       o_ref:  (TB, 128) f32
    x = x_ref[...]

    # fc1 + ReLU (bf16 inputs, f32 accumulation on the MXU)
    h = jnp.dot(x, w1_ref[...], preferred_element_type=jnp.float32) + b1_ref[...]
    h = jnp.maximum(h, 0.0)          # padded hidden lanes stay exactly 0

    # fc2 (tiny matmul, kept in f32)
    logits = jnp.dot(h, w2_ref[...], preferred_element_type=jnp.float32) + b2_ref[...]

    # Mask the padded output columns so they don't contribute to the softmax normalizer.
    col = lax.broadcasted_iota(jnp.int32, logits.shape, 1)
    logits = jnp.where(col < OUT, logits, jnp.float32(-1e30))

    # Numerically stable log_softmax over the last axis.
    m = jnp.max(logits, axis=-1, keepdims=True)
    z = logits - m
    lse = jnp.log(jnp.sum(jnp.exp(z), axis=-1, keepdims=True))
    o_ref[...] = (z - lse).astype(o_ref.dtype)


def mlp_forward(x_nchw, w1, b1, w2, b2, *, max_tb=512):
    """x_nchw: (B, 3, 32, 32) f32. Weights in (in_features, out_features) layout."""
    B = x_nchw.shape[0]
    # Flatten exactly like PyTorch's x.contiguous().view(B, -1) on NCHW input.
    x_flat = x_nchw.reshape(B, -1)

    # Batch tile: multiple of 8 sublanes, capped so 2 bf16 buffers + weights fit v7x VMEM.
    TB = min(max_tb, max(8, _round_up(B, 8)))
    B_pad = _round_up(B, TB)
    if B_pad != B:
        x_flat = jnp.pad(x_flat, ((0, B_pad - B), (0, 0)))

    # Zero-pad feature dims to lane-dense widths; cast the dominant stream to bf16.
    x_bf = x_flat.astype(jnp.bfloat16)
    w1_p = jnp.pad(w1, ((0, 0), (0, HIDDEN_PAD - HIDDEN))).astype(jnp.bfloat16)
    b1_p = jnp.pad(b1, (0, HIDDEN_PAD - HIDDEN)).reshape(1, HIDDEN_PAD).astype(jnp.float32)
    w2_p = jnp.pad(w2, ((0, HIDDEN_PAD - HIDDEN), (0, OUT_PAD - OUT))).astype(jnp.float32)
    b2_p = jnp.pad(b2, (0, OUT_PAD - OUT)).reshape(1, OUT_PAD).astype(jnp.float32)

    grid = (B_pad // TB,)
    out = pl.pallas_call(
        mlp_kernel,
        out_shape=jax.ShapeDtypeStruct((B_pad, OUT_PAD), jnp.float32),
        grid_spec=pltpu.PrefetchScalarGridSpec(
            num_scalar_prefetch=0,
            grid=grid,
            in_specs=[
                pl.BlockSpec((TB, IN_FEATURES), lambda i: (i, 0)),          # x: streamed
                pl.BlockSpec((IN_FEATURES, HIDDEN_PAD), lambda i: (0, 0)),  # w1: resident
                pl.BlockSpec((1, HIDDEN_PAD), lambda i: (0, 0)),            # b1: resident
                pl.BlockSpec((HIDDEN_PAD, OUT_PAD), lambda i: (0, 0)),      # w2: resident
                pl.BlockSpec((1, OUT_PAD), lambda i: (0, 0)),               # b2: resident
            ],
            out_specs=pl.BlockSpec((TB, OUT_PAD), lambda i: (i, 0)),
        ),
        compiler_params=pltpu.CompilerParams(
            dimension_semantics=("parallel",),
            vmem_limit_bytes=48 * 1024 * 1024,
        ),
    )(x_bf, w1_p, b1_p, w2_p, b2_p)

    # Drop batch padding and padded logit columns.
    return out[:B, :OUT]


def init_params(key):
    # Deterministic init mirroring PyTorch nn.Linear defaults:
    # U(-1/sqrt(fan_in), 1/sqrt(fan_in)) for both weight and bias.
    k1, k2, k3, k4 = jax.random.split(key, 4)
    bound1 = 1.0 / jnp.sqrt(jnp.float32(IN_FEATURES))
    bound2 = 1.0 / jnp.sqrt(jnp.float32(HIDDEN))
    w1 = jax.random.uniform(k1, (IN_FEATURES, HIDDEN), jnp.float32, -bound1, bound1)
    b1 = jax.random.uniform(k2, (HIDDEN,), jnp.float32, -bound1, bound1)
    w2 = jax.random.uniform(k3, (HIDDEN, OUT), jnp.float32, -bound2, bound2)
    b2 = jax.random.uniform(k4, (OUT,), jnp.float32, -bound2, bound2)
    return w1, b1, w2, b2


def mlp_reference(x_nchw, w1, b1, w2, b2):
    # Pure-JAX f32 reference mirroring the PyTorch forward.
    x = x_nchw.reshape(x_nchw.shape[0], -1)
    h = jnp.maximum(x @ w1 + b1, 0.0)
    logits = h @ w2 + b2
    return jax.nn.log_softmax(logits, axis=-1)


if __name__ == "__main__":
    key = jax.random.PRNGKey(0)
    kx, kp = jax.random.split(key)

    B = 2
    x = jax.random.normal(kx, (B, 3, 32, 32), jnp.float32)  # NCHW like PyTorch
    w1, b1, w2, b2 = init_params(kp)

    out = mlp_forward(x, w1, b1, w2, b2)
    out = jax.block_until_ready(out)

    assert out.shape == (B, OUT)
    # Sanity: log_softmax rows should sum (in prob space) to ~1.
    probs_sum = jnp.sum(jnp.exp(out), axis=-1)
    assert bool(jnp.all(jnp.abs(probs_sum - 1.0) < 1e-3))
    # Correctness vs pure-JAX f32 reference (bf16 x/w1 introduces small error).
    ref = mlp_reference(x, w1, b1, w2, b2)
    assert bool(jnp.all(jnp.abs(out - ref) < 5e-2))

    print("KERNEL_OK")
</pallas_src>

<mosaic_0001>
module attributes {stable_mosaic.version = 11 : i64} {
  func.func @mlp_kernel(%arg0: i32, %arg1: memref<8x3072xbf16, #tpu.memory_space<vmem>>, %arg2: memref<3072x128xbf16, #tpu.memory_space<vmem>>, %arg3: memref<1x128xf32, #tpu.memory_space<vmem>>, %arg4: memref<128x128xf32, #tpu.memory_space<vmem>>, %arg5: memref<1x128xf32, #tpu.memory_space<vmem>>, %arg6: memref<8x128xf32, #tpu.memory_space<vmem>>) attributes {dimension_semantics = [#tpu.dimension_semantics<parallel>], iteration_bounds = array<i64: 1>, scalar_prefetch = 0 : i64, scratch_operands = 0 : i64, tpu.core_type = #tpu.core_type<tc>, window_params = [{transform_indices = @transform_0, window_bounds = array<i64: 8, 3072>}, {pipeline_mode = #tpu.pipeline_mode<synchronous>, transform_indices = @transform_1, window_bounds = array<i64: 3072, 128>}, {pipeline_mode = #tpu.pipeline_mode<synchronous>, transform_indices = @transform_2, window_bounds = array<i64: 1, 128>}, {pipeline_mode = #tpu.pipeline_mode<synchronous>, transform_indices = @transform_3, window_bounds = array<i64: 128, 128>}, {pipeline_mode = #tpu.pipeline_mode<synchronous>, transform_indices = @transform_4, window_bounds = array<i64: 1, 128>}, {transform_indices = @transform_5, window_bounds = array<i64: 8, 128>}]} {
    %c0 = arith.constant 0 : index
    %c0_0 = arith.constant 0 : index
    %0 = vector.load %arg1[%c0, %c0_0] : memref<8x3072xbf16, #tpu.memory_space<vmem>>, vector<8x3072xbf16>
    %c0_1 = arith.constant 0 : index
    %c0_2 = arith.constant 0 : index
    %1 = vector.load %arg2[%c0_1, %c0_2] : memref<3072x128xbf16, #tpu.memory_space<vmem>>, vector<3072x128xbf16>
    %cst = arith.constant dense<0.000000e+00> : vector<8x128xf32>
    %2 = tpu.matmul %0, %1, %cst {dimension_numbers = #tpu.dot_dimension_numbers<[1], [0], [0], [1], [0, 0, 1, 1], [], []>} : vector<8x3072xbf16>, vector<3072x128xbf16>, vector<8x128xf32> -> vector<8x128xf32>
    %c0_3 = arith.constant 0 : index
    %c0_4 = arith.constant 0 : index
    %3 = vector.load %arg3[%c0_3, %c0_4] : memref<1x128xf32, #tpu.memory_space<vmem>>, vector<1x128xf32>
    %4 = vector.broadcast %3 : vector<1x128xf32> to vector<8x128xf32>
    %5 = arith.addf %2, %4 : vector<8x128xf32>
    %cst_5 = arith.constant 0.000000e+00 : f32
    %6 = vector.broadcast %cst_5 : f32 to vector<8x128xf32>
    %7 = arith.maximumf %5, %6 : vector<8x128xf32>
    %c0_6 = arith.constant 0 : index
    %c0_7 = arith.constant 0 : index
    %8 = vector.load %arg4[%c0_6, %c0_7] : memref<128x128xf32, #tpu.memory_space<vmem>>, vector<128x128xf32>
    %cst_8 = arith.constant dense<0.000000e+00> : vector<8x128xf32>
    %9 = tpu.matmul %7, %8, %cst_8 {dimension_numbers = #tpu.dot_dimension_numbers<[1], [0], [0], [1], [0, 0, 1, 1], [], []>} : vector<8x128xf32>, vector<128x128xf32>, vector<8x128xf32> -> vector<8x128xf32>
    %c0_9 = arith.constant 0 : index
    %c0_10 = arith.constant 0 : index
    %10 = vector.load %arg5[%c0_9, %c0_10] : memref<1x128xf32, #tpu.memory_space<vmem>>, vector<1x128xf32>
    %11 = vector.broadcast %10 : vector<1x128xf32> to vector<8x128xf32>
    %12 = arith.addf %9, %11 : vector<8x128xf32>
    %13 = tpu.iota {dimensions = array<i32: 1>} : vector<8x128xi32>
    %c10_i32 = arith.constant 10 : i32
    %14 = vector.broadcast %c10_i32 : i32 to vector<8x128xi32>
    %15 = arith.cmpi slt, %13, %14 : vector<8x128xi32>
    %cst_11 = arith.constant -1.000000e+30 : f32
    %16 = vector.broadcast %cst_11 : f32 to vector<8x128xf32>
    %17 = arith.select %15, %12, %16 : vector<8x128xi1>, vector<8x128xf32>
    %cst_12 = arith.constant dense<0xFF800000> : vector<8xf32>
    %18 = vector.multi_reduction <maximumf>, %17, %cst_12 [1] : vector<8x128xf32> to vector<8xf32>
    %19 = vector.shape_cast %18 : vector<8xf32> to vector<8x1xf32>
    %20 = vector.broadcast %19 : vector<8x1xf32> to vector<8x128xf32>
    %21 = arith.subf %17, %20 : vector<8x128xf32>
    %22 = math.exp %21 : vector<8x128xf32>
    %cst_13 = arith.constant dense<0.000000e+00> : vector<8xf32>
    %23 = vector.multi_reduction <add>, %22, %cst_13 [1] : vector<8x128xf32> to vector<8xf32>
    %24 = vector.shape_cast %23 : vector<8xf32> to vector<8x1xf32>
    %25 = math.log %24 : vector<8x1xf32>
    %26 = vector.broadcast %25 : vector<8x1xf32> to vector<8x128xf32>
    %27 = arith.subf %21, %26 : vector<8x128xf32>
    %c0_14 = arith.constant 0 : index
    %c0_15 = arith.constant 0 : index
    %28 = vector.load %arg6[%c0_14, %c0_15] : memref<8x128xf32, #tpu.memory_space<vmem>>, vector<8x128xf32>
    tpu.vector_store %arg6[%c0_14, %c0_15], %27 {strides = array<i32>} : memref<8x128xf32, #tpu.memory_space<vmem>>, vector<8x128xf32>,
    return
  }
  func.func @transform_0(%arg0: i32) -> (i32, i32) {
    %c0_i32 = arith.constant 0 : i32
    %c0_i32_0 = arith.constant 0 : i32
    return %arg0, %c0_i32 : i32, i32
  }
  func.func @transform_1(%arg0: i32) -> (i32, i32) {
    %c0_i32 = arith.constant 0 : i32
    %c0_i32_0 = arith.constant 0 : i32
    %c0_i32_1 = arith.constant 0 : i32
    return %c0_i32, %c0_i32_0 : i32, i32
  }
  func.func @transform_2(%arg0: i32) -> (i32, i32) {
    %c0_i32 = arith.constant 0 : i32
    %c0_i32_0 = arith.constant 0 : i32
    %c0_i32_1 = arith.constant 0 : i32
    return %c0_i32, %c0_i32_0 : i32, i32
  }
  func.func @transform_3(%arg0: i32) -> (i32, i32) {
    %c0_i32 = arith.constant 0 : i32
    %c0_i32_0 = arith.constant 0 : i32
    %c0_i32_1 = arith.constant 0 : i32
    return %c0_i32, %c0_i32_0 : i32, i32
  }
  func.func @transform_4(%arg0: i32) -> (i32, i32) {
    %c0_i32 = arith.constant 0 : i32
    %c0_i32_0 = arith.constant 0 : i32
    %c0_i32_1 = arith.constant 0 : i32
    return %c0_i32, %c0_i32_0 : i32, i32
  }
  func.func @transform_5(%arg0: i32) -> (i32, i32) {
    %c0_i32 = arith.constant 0 : i32
    %c0_i32_0 = arith.constant 0 : i32
    return %arg0, %c0_i32 : i32, i32
  }
}

</mosaic_0001>

<llo_original>
// kernel: tpu_custom_call.1
$region0: #{tpu_custom_call.1}
  #allocation0 [shape = 'u32[]', space=smem, size = 0x4, offset = 0x4, fixed_abs, tag = 'smem constant byte address 0x4 - core index']
  #allocation1 [shape = 'u32[144,128]{1,0:T(1,128)}', space=vmem, size = 0x12000, scoped, tag = 'internal scratch']
  %s0 = inlined_call_operand.hbm [shape: bf16[8,3072], index: 0, kind: input, shape index: {}]
  %s1 = inlined_call_operand.hbm [shape: bf16[3072,128], index: 1, kind: input, shape index: {}]
  %s2 = inlined_call_operand.vmem [shape: f32[1,128], index: 2, kind: input, shape index: {}]
  %s3 = inlined_call_operand.hbm [shape: f32[128,128], index: 3, kind: input, shape index: {}]
  %s4 = inlined_call_operand.vmem [shape: f32[1,128], index: 4, kind: input, shape index: {}]
  %s5 = inlined_call_operand.hbm [shape: f32[8,128], index: 5, kind: output, shape index: {}]
  %s6 = sld [smem:[#allocation0]]
  $region42: #{tpu_custom_call.1} parent=0
    _
  %s8 = ssub.s32 1, %s6
  %s9 = scalar_select 0, %s8, %s6
  $region1: #{tpu_custom_call.1} parent=0
    #allocation2 [shape = 'u8[49152]{0}', space=vmem, size = 0xc000, scoped, tag = 'input window, operand 0, single buffered']
    #allocation3 [shape = 's32[1]{0}', space=sflag, size = 0x4, scoped, tag = 'scoped memory for tpu_custom_call.1']
    #allocation4 [shape = 's32[1]{0}', space=sflag, size = 0x4, scoped, tag = 'scoped memory for tpu_custom_call.1']
    #allocation5 [shape = 'u8[786432]{0}', space=vmem, size = 0xc0000, scoped, tag = 'input window, operand 1, single buffered']
    #allocation6 [shape = 's32[1]{0}', space=sflag, size = 0x4, scoped, tag = 'scoped memory for tpu_custom_call.1']
    #allocation7 [shape = 'u8[65536]{0}', space=vmem, size = 0x10000, scoped, tag = 'input window, operand 3, single buffered']
    #allocation8 [shape = 'u8[4096]{0}', space=vmem, size = 0x1000, scoped, tag = 'output window, operand 0, single buffered']
    %10 = vsyncpa [#allocation3], 0
    %11 = vsyncpa [#allocation6], 0
    %12 = vsyncpa [#allocation4], 0
    // Predicated region
    $region2: #{tpu_custom_call.1} parent=1 // pred_check
      _
    $region3: #{tpu_custom_call.1} parent=1 // pred_check_branch
      %14 = sbr.rel (0) target = $region5
    $region4: #{tpu_custom_call.1} parent=1 // pred_region
      %s16 = ssub.s32 1536, 1536
      %17 = vsyncadd [#allocation3], %s16
      %s19 = sshll.u32 [#allocation2], 4
      %s20 = int_to_ptr.vmem [resolvable:$true] %s19
      %22 = dma.hbm_to_vmem [thread:$0]  %s0, 1536, %s20, [#allocation3]
    $region5: #{tpu_custom_call.1} parent=1 // pred_fallthru
      _
    // Predicated region
    $region6: #{tpu_custom_call.1} parent=1 // pred_check
      _
    $region7: #{tpu_custom_call.1} parent=1 // pred_check_branch
      %24 = sbr.rel (0) target = $region9
    $region8: #{tpu_custom_call.1} parent=1 // pred_region
      %s26 = ssub.s32 24576, 24576
      %27 = vsyncadd [#allocation6], %s26
      %s28 = sshll.u32 [#allocation5], 4
      %s29 = int_to_ptr.vmem [resolvable:$true] %s28
      %34 = dma.hbm_to_vmem [thread:$0]  %s1, 24576, %s29, [#allocation6], 64, 64, 4
    $region9: #{tpu_custom_call.1} parent=1 // pred_fallthru
      _
    // Predicated region
    $region10: #{tpu_custom_call.1} parent=1 // pred_check
      _
    $region11: #{tpu_custom_call.1} parent=1 // pred_check_branch
      %36 = sbr.rel (0) target = $region13
    $region12: #{tpu_custom_call.1} parent=1 // pred_region
      _
    $region13: #{tpu_custom_call.1} parent=1 // pred_fallthru
      _
    // Predicated region
    $region14: #{tpu_custom_call.1} parent=1 // pred_check
      _
    $region15: #{tpu_custom_call.1} parent=1 // pred_check_branch
      %38 = sbr.rel (0) target = $region17
    $region16: #{tpu_custom_call.1} parent=1 // pred_region
      %s40 = ssub.s32 2048, 2048
      %41 = vsyncadd [#allocation6], %s40
      %s42 = sshll.u32 [#allocation7], 4
      %s43 = int_to_ptr.vmem [resolvable:$true] %s42
      %48 = dma.hbm_to_vmem [thread:$0]  %s3, 2048, %s43, [#allocation6], 128, 128, 8
    $region17: #{tpu_custom_call.1} parent=1 // pred_fallthru
      _
    // Predicated region
    $region18: #{tpu_custom_call.1} parent=1 // pred_check
      _
    $region19: #{tpu_custom_call.1} parent=1 // pred_check_branch
      %50 = sbr.rel (0) target = $region21
    $region20: #{tpu_custom_call.1} parent=1 // pred_region
      _
    $region21: #{tpu_custom_call.1} parent=1 // pred_fallthru
      _
    // Predicated region
    $region22: #{tpu_custom_call.1} parent=1 // pred_check
      _
    $region23: #{tpu_custom_call.1} parent=1 // pred_check_branch
      %52 = sbr.rel (0) target = $region25
    $region24: #{tpu_custom_call.1} parent=1 // pred_region
      %53 = dma.done [#allocation3], 1536
    $region25: #{tpu_custom_call.1} parent=1 // pred_fallthru
      _
    // Predicated region
    $region26: #{tpu_custom_call.1} parent=1 // pred_check
      _
    $region27: #{tpu_custom_call.1} parent=1 // pred_check_branch
      %55 = sbr.rel (0) target = $region29
    $region28: #{tpu_custom_call.1} parent=1 // pred_region
      %56 = dma.done [#allocation6], 24576
    $region29: #{tpu_custom_call.1} parent=1 // pred_fallthru
      _
    // Predicated region
    $region30: #{tpu_custom_call.1} parent=1 // pred_check
      _
    $region31: #{tpu_custom_call.1} parent=1 // pred_check_branch
      %58 = sbr.rel (0) target = $region33
    $region32: #{tpu_custom_call.1} parent=1 // pred_region
      %59 = dma.done [#allocation6], 2048
    $region33: #{tpu_custom_call.1} parent=1 // pred_fallthru
      _
    %v61 = vld [vmem:[#allocation2] sm:$0xff]
    %v62 = vld [vmem:[#allocation2 + $0x8] sm:$0xff]
    %v63 = vld [vmem:[#allocation2 + $0x10] sm:$0xff]
    %v64 = vld [vmem:[#allocation2 + $0x18] sm:$0xff]
    %v65 = vld [vmem:[#allocation2 + $0x20] sm:$0xff]
    %v66 = vld [vmem:[#allocation2 + $0x28] sm:$0xff]
    %v67 = vld [vmem:[#allocation2 + $0x30] sm:$0xff]
    %v68 = vld [vmem:[#allocation2 + $0x38] sm:$0xff]
    %v69 = vld [vmem:[#allocation2 + $0x40] sm:$0xff]
    %v70 = vld [vmem:[#allocation2 + $0x48] sm:$0xff]
    %v71 = vld [vmem:[#allocation2 + $0x50] sm:$0xff]
    %v72 = vld [vmem:[#allocation2 + $0x58] sm:$0xff]
    %v73 = vld [vmem:[#allocation5] sm:$0xf]
    %v74 = vld [vmem:[#allocation5 + $0x4] sm:$0xf]
    %v75 = vld [vmem:[#allocation5 + $0x8] sm:$0xf]
    %v76 = vld [vmem:[#allocation5 + $0xc] sm:$0xf]
    %v77 = vld [vmem:[#allocation5 + $0x10] sm:$0xf]
    %v78 = vld [vmem:[#allocation5 + $0x14] sm:$0xf]
    %v79 = vld [vmem:[#allocation5 + $0x18] sm:$0xf]
    %v80 = vld [vmem:[#allocation5 + $0x1c] sm:$0xf]
    %v81 = vld [vmem:[#allocation5 + $0x20] sm:$0xf]
    %v82 = vld [vmem:[#allocation5 + $0x24] sm:$0xf]
    %v83 = vld [vmem:[#allocation5 + $0x28] sm:$0xf]
    %v84 = vld [vmem:[#allocation5 + $0x2c] sm:$0xf]
    %v85 = vld [vmem:[#allocation5 + $0x30] sm:$0xf]
    %v86 = vld [vmem:[#allocation5 + $0x34] sm:$0xf]
    %v87 = vld [vmem:[#allocation5 + $0x38] sm:$0xf]
    %v88 = vld [vmem:[#allocation5 + $0x3c] sm:$0xf]
    %v89 = vld [vmem:[#allocation5 + $0x40] sm:$0xf]
    %v90 = vld [vmem:[#allocation5 + $0x44] sm:$0xf]
    %v91 = vld [vmem:[#allocation5 + $0x48] sm:$0xf]
    %v92 = vld [vmem:[#allocation5 + $0x4c] sm:$0xf]
    %v93 = vld [vmem:[#allocation5 + $0x50] sm:$0xf]
    %v94 = vld [vmem:[#allocation5 + $0x54] sm:$0xf]
    %v95 = vld [vmem:[#allocation5 + $0x58] sm:$0xf]
    %v96 = vld [vmem:[#allocation5 + $0x5c] sm:$0xf]
    %v97 = vld [vmem:[#allocation5 + $0x60] sm:$0xf]
    %v98 = vld [vmem:[#allocation5 + $0x64] sm:$0xf]
    %v99 = vld [vmem:[#allocation5 + $0x68] sm:$0xf]
    %v100 = vld [vmem:[#allocation5 + $0x6c] sm:$0xf]
    %v101 = vld [vmem:[#allocation5 + $0x70] sm:$0xf]
    %v102 = vld [vmem:[#allocation5 + $0x74] sm:$0xf]
    %v103 = vld [vmem:[#allocation5 + $0x78] sm:$0xf]
    %v104 = vld [vmem:[#allocation5 + $0x7c] sm:$0xf]
    %v105 = vld [vmem:[#allocation5 + $0x80] sm:$0xf]
    %v106 = vld [vmem:[#allocation5 + $0x84] sm:$0xf]
    %v107 = vld [vmem:[#allocation5 + $0x88] sm:$0xf]
    %v108 = vld [vmem:[#allocation5 + $0x8c] sm:$0xf]
    %v109 = vld [vmem:[#allocation5 + $0x90] sm:$0xf]
    %v110 = vld [vmem:[#allocation5 + $0x94] sm:$0xf]
    %v111 = vld [vmem:[#allocation5 + $0x98] sm:$0xf]
    %v112 = vld [vmem:[#allocation5 + $0x9c] sm:$0xf]
    %v113 = vld [vmem:[#allocation5 + $0xa0] sm:$0xf]
    %v114 = vld [vmem:[#allocation5 + $0xa4] sm:$0xf]
    %v115 = vld [vmem:[#allocation5 + $0xa8] sm:$0xf]
    %v116 = vld [vmem:[#allocation5 + $0xac] sm:$0xf]
    %v117 = vld [vmem:[#allocation5 + $0xb0] sm:$0xf]
    %v118 = vld [vmem:[#allocation5 + $0xb4] sm:$0xf]
    %v119 = vld [vmem:[#allocation5 + $0xb8] sm:$0xf]
    %v120 = vld [vmem:[#allocation5 + $0xbc] sm:$0xf]
    %v121 = vld [vmem:[#allocation5 + $0xc0] sm:$0xf]
    %v122 = vld [vmem:[#allocation5 + $0xc4] sm:$0xf]
    %v123 = vld [vmem:[#allocation5 + $0xc8] sm:$0xf]
    %v124 = vld [vmem:[#allocation5 + $0xcc] sm:$0xf]
    %v125 = vld [vmem:[#allocation5 + $0xd0] sm:$0xf]
    %v126 = vld [vmem:[#allocation5 + $0xd4] sm:$0xf]
    %v127 = vld [vmem:[#allocation5 + $0xd8] sm:$0xf]
    %v128 = vld [vmem:[#allocation5 + $0xdc] sm:$0xf]
    %v129 = vld [vmem:[#allocation5 + $0xe0] sm:$0xf]
    %v130 = vld [vmem:[#allocation5 + $0xe4] sm:$0xf]
    %v131 = vld [vmem:[#allocation5 + $0xe8] sm:$0xf]
    %v132 = vld [vmem:[#allocation5 + $0xec] sm:$0xf]
    %v133 = vld [vmem:[#allocation5 + $0xf0] sm:$0xf]
    %v134 = vld [vmem:[#allocation5 + $0xf4] sm:$0xf]
    %v135 = vld [vmem:[#allocation5 + $0xf8] sm:$0xf]
    %v136 = vld [vmem:[#allocation5 + $0xfc] sm:$0xf]
    %v137 = vld [vmem:[#allocation5 + $0x100] sm:$0xf]
    %v138 = vld [vmem:[#allocation5 + $0x104] sm:$0xf]
    %v139 = vld [vmem:[#allocation5 + $0x108] sm:$0xf]
    %v140 = vld [vmem:[#allocation5 + $0x10c] sm:$0xf]
    %v141 = vld [vmem:[#allocation5 + $0x110] sm:$0xf]
    %v142 = vld [vmem:[#allocation5 + $0x114] sm:$0xf]
    %v143 = vld [vmem:[#allocation5 + $0x118] sm:$0xf]
    %v144 = vld [vmem:[#allocation5 + $0x11c] sm:$0xf]
    %v145 = vld [vmem:[#allocation5 + $0x120] sm:$0xf]
    %v146 = vld [vmem:[#allocation5 + $0x124] sm:$0xf]
    %v147 = vld [vmem:[#allocation5 + $0x128] sm:$0xf]
    %v148 = vld [vmem:[#allocation5 + $0x12c] sm:$0xf]
    %v149 = vld [vmem:[#allocation5 + $0x130] sm:$0xf]
    %v150 = vld [vmem:[#allocation5 + $0x134] sm:$0xf]
    %v151 = vld [vmem:[#allocation5 + $0x138] sm:$0xf]
    %v152 = vld [vmem:[#allocation5 + $0x13c] sm:$0xf]
    %v153 = vld [vmem:[#allocation5 + $0x140] sm:$0xf]
    %v154 = vld [vmem:[#allocation5 + $0x144] sm:$0xf]
    %v155 = vld [vmem:[#allocation5 + $0x148] sm:$0xf]
    %v156 = vld [vmem:[#allocation5 + $0x14c] sm:$0xf]
    %v157 = vld [vmem:[#allocation5 + $0x150] sm:$0xf]
    %v158 = vld [vmem:[#allocation5 + $0x154] sm:$0xf]
    %v159 = vld [vmem:[#allocation5 + $0x158] sm:$0xf]
    %v160 = vld [vmem:[#allocation5 + $0x15c] sm:$0xf]
    %v161 = vld [vmem:[#allocation5 + $0x160] sm:$0xf]
    %v162 = vld [vmem:[#allocation5 + $0x164] sm:$0xf]
    %v163 = vld [vmem:[#allocation5 + $0x168] sm:$0xf]
    %v164 = vld [vmem:[#allocation5 + $0x16c] sm:$0xf]
    %v165 = vld [vmem:[#allocation5 + $0x170] sm:$0xf]
    %v166 = vld [vmem:[#allocation5 + $0x174] sm:$0xf]
    %v167 = vld [vmem:[#allocation5 + $0x178] sm:$0xf]
    %v168 = vld [vmem:[#allocation5 + $0x17c] sm:$0xf]
    %v169 = vld [vmem:[#allocation5 + $0x180] sm:$0xf]
    %v170 = vld [vmem:[#allocation5 + $0x184] sm:$0xf]
    %v171 = vld [vmem:[#allocation5 + $0x188] sm:$0xf]
    %v172 = vld [vmem:[#allocation5 + $0x18c] sm:$0xf]
    %v173 = vld [vmem:[#allocation5 + $0x190] sm:$0xf]
    %v174 = vld [vmem:[#allocation5 + $0x194] sm:$0xf]
    %v175 = vld [vmem:[#allocation5 + $0x198] sm:$0xf]
    %v176 = vld [vmem:[#allocation5 + $0x19c] sm:$0xf]
    %v177 = vld [vmem:[#allocation5 + $0x1a0] sm:$0xf]
    %v178 = vld [vmem:[#allocation5 + $0x1a4] sm:$0xf]
    %v179 = vld [vmem:[#allocation5 + $0x1a8] sm:$0xf]
    %v180 = vld [vmem:[#allocation5 + $0x1ac] sm:$0xf]
    %v181 = vld [vmem:[#allocation5 + $0x1b0] sm:$0xf]
    %v182 = vld [vmem:[#allocation5 + $0x1b4] sm:$0xf]
    %v183 = vld [vmem:[#allocation5 + $0x1b8] sm:$0xf]
    %v184 = vld [vmem:[#allocation5 + $0x1bc] sm:$0xf]
    %v185 = vld [vmem:[#allocation5 + $0x1c0] sm:$0xf]
    %v186 = vld [vmem:[#allocation5 + $0x1c4] sm:$0xf]
    %v187 = vld [vmem:[#allocation5 + $0x1c8] sm:$0xf]
    %v188 = vld [vmem:[#allocation5 + $0x1cc] sm:$0xf]
    %v189 = vld [vmem:[#allocation5 + $0x1d0] sm:$0xf]
    %v190 = vld [vmem:[#allocation5 + $0x1d4] sm:$0xf]
    %v191 = vld [vmem:[#allocation5 + $0x1d8] sm:$0xf]
    %v192 = vld [vmem:[#allocation5 + $0x1dc] sm:$0xf]
    %v193 = vld [vmem:[#allocation5 + $0x1e0] sm:$0xf]
    %v194 = vld [vmem:[#allocation5 + $0x1e4] sm:$0xf]
    %v195 = vld [vmem:[#allocation5 + $0x1e8] sm:$0xf]
    %v196 = vld [vmem:[#allocation5 + $0x1ec] sm:$0xf]
    %v197 = vld [vmem:[#allocation5 + $0x1f0] sm:$0xf]
    %v198 = vld [vmem:[#allocation5 + $0x1f4] sm:$0xf]
    %v199 = vld [vmem:[#allocation5 + $0x1f8] sm:$0xf]
    %v200 = vld [vmem:[#allocation5 + $0x1fc] sm:$0xf]
    %v201 = vld [vmem:[#allocation5 + $0x200] sm:$0xf]
    %v202 = vld [vmem:[#allocation5 + $0x204] sm:$0xf]
    %v203 = vld [vmem:[#allocation5 + $0x208] sm:$0xf]
    %v204 = vld [vmem:[#allocation5 + $0x20c] sm:$0xf]
    %v205 = vld [vmem:[#allocation5 + $0x210] sm:$0xf]
    %v206 = vld [vmem:[#allocation5 + $0x214] sm:$0xf]
    %v207 = vld [vmem:[#allocation5 + $0x218] sm:$0xf]
    %v208 = vld [vmem:[#allocation5 + $0x21c] sm:$0xf]
    %v209 = vld [vmem:[#allocation5 + $0x220] sm:$0xf]
    %v210 = vld [vmem:[#allocation5 + $0x224] sm:$0xf]
    %v211 = vld [vmem:[#allocation5 + $0x228] sm:$0xf]
    %v212 = vld [vmem:[#allocation5 + $0x22c] sm:$0xf]
    %v213 = vld [vmem:[#allocation5 + $0x230] sm:$0xf]
    %v214 = vld [vmem:[#allocation5 + $0x234] sm:$0xf]
    %v215 = vld [vmem:[#allocation5 + $0x238] sm:$0xf]
    %v216 = vld [vmem:[#allocation5 + $0x23c] sm:$0xf]
    %v217 = vld [vmem:[#allocation5 + $0x240] sm:$0xf]
    %v218 = vld [vmem:[#allocation5 + $0x244] sm:$0xf]
    %v219 = vld [vmem:[#allocation5 + $0x248] sm:$0xf]
    %v220 = vld [vmem:[#allocation5 + $0x24c] sm:$0xf]
    %v221 = vld [vmem:[#allocation5 + $0x250] sm:$0xf]
    %v222 = vld [vmem:[#allocation5 + $0x254] sm:$0xf]
    %v223 = vld [vmem:[#allocation5 + $0x258] sm:$0xf]
    %v224 = vld [vmem:[#allocation5 + $0x25c] sm:$0xf]
    %v225 = vld [vmem:[#allocation5 + $0x260] sm:$0xf]
    %v226 = vld [vmem:[#allocation5 + $0x264] sm:$0xf]
    %v227 = vld [vmem:[#allocation5 + $0x268] sm:$0xf]
    %v228 = vld [vmem:[#allocation5 + $0x26c] sm:$0xf]
    %v229 = vld [vmem:[#allocation5 + $0x270] sm:$0xf]
    %v230 = vld [vmem:[#allocation5 + $0x274] sm:$0xf]
    %v231 = vld [vmem:[#allocation5 + $0x278] sm:$0xf]
    %v232 = vld [vmem:[#allocation5 + $0x27c] sm:$0xf]
    %v233 = vld [vmem:[#allocation5 + $0x280] sm:$0xf]
    %v234 = vld [vmem:[#allocation5 + $0x284] sm:$0xf]
    %v235 = vld [vmem:[#allocation5 + $0x288] sm:$0xf]
    %v236 = vld [vmem:[#allocation5 + $0x28c] sm:$0xf]
    %v237 = vld [vmem:[#allocation5 + $0x290] sm:$0xf]
    %v238 = vld [vmem:[#allocation5 + $0x294] sm:$0xf]
    %v239 = vld [vmem:[#allocation5 + $0x298] sm:$0xf]
    %v240 = vld [vmem:[#allocation5 + $0x29c] sm:$0xf]
    %v241 = vld [vmem:[#allocation5 + $0x2a0] sm:$0xf]
    %v242 = vld [vmem:[#allocation5 + $0x2a4] sm:$0xf]
    %v243 = vld [vmem:[#allocation5 + $0x2a8] sm:$0xf]
    %v244 = vld [vmem:[#allocation5 + $0x2ac] sm:$0xf]
    %v245 = vld [vmem:[#allocation5 + $0x2b0] sm:$0xf]
    %v246 = vld [vmem:[#allocation5 + $0x2b4] sm:$0xf]
    %v247 = vld [vmem:[#allocation5 + $0x2b8] sm:$0xf]
    %v248 = vld [vmem:[#allocation5 + $0x2bc] sm:$0xf]
    %v249 = vld [vmem:[#allocation5 + $0x2c0] sm:$0xf]
    %v250 = vld [vmem:[#allocation5 + $0x2c4] sm:$0xf]
    %v251 = vld [vmem:[#allocation5 + $0x2c8] sm:$0xf]
    %v252 = vld [vmem:[#allocation5 + $0x2cc] sm:$0xf]
    %v253 = vld [vmem:[#allocation5 + $0x2d0] sm:$0xf]
    %v254 = vld [vmem:[#allocation5 + $0x2d4] sm:$0xf]
    %v255 = vld [vmem:[#allocation5 + $0x2d8] sm:$0xf]
    %v256 = vld [vmem:[#allocation5 + $0x2dc] sm:$0xf]
    %v257 = vld [vmem:[#allocation5 + $0x2e0] sm:$0xf]
    %v258 = vld [vmem:[#allocation5 + $0x2e4] sm:$0xf]
    %v259 = vld [vmem:[#allocation5 + $0x2e8] sm:$0xf]
    %v260 = vld [vmem:[#allocation5 + $0x2ec] sm:$0xf]
    %v261 = vld [vmem:[#allocation5 + $0x2f0] sm:$0xf]
    %v262 = vld [vmem:[#allocation5 + $0x2f4] sm:$0xf]
    %v263 = vld [vmem:[#allocation5 + $0x2f8] sm:$0xf]
    %v264 = vld [vmem:[#allocation5 + $0x2fc] sm:$0xf]
    %v265 = vld [vmem:[#allocation5 + $0x300] sm:$0xf]
    %v266 = vld [vmem:[#allocation5 + $0x304] sm:$0xf]
    %v267 = vld [vmem:[#allocation5 + $0x308] sm:$0xf]
    %v268 = vld [vmem:[#allocation5 + $0x30c] sm:$0xf]
    %v269 = vld [vmem:[#allocation5 + $0x310] sm:$0xf]
    %v270 = vld [vmem:[#allocation5 + $0x314] sm:$0xf]
    %v271 = vld [vmem:[#allocation5 + $0x318] sm:$0xf]
    %v272 = vld [vmem:[#allocation5 + $0x31c] sm:$0xf]
    %v273 = vld [vmem:[#allocation5 + $0x320] sm:$0xf]
    %v274 = vld [vmem:[#allocation5 + $0x324] sm:$0xf]
    %v275 = vld [vmem:[#allocation5 + $0x328] sm:$0xf]
    %v276 = vld [vmem:[#allocation5 + $0x32c] sm:$0xf]
    %v277 = vld [vmem:[#allocation5 + $0x330] sm:$0xf]
    %v278 = vld [vmem:[#allocation5 + $0x334] sm:$0xf]
    %v279 = vld [vmem:[#allocation5 + $0x338] sm:$0xf]
    %v280 = vld [vmem:[#allocation5 + $0x33c] sm:$0xf]
    %v281 = vld [vmem:[#allocation5 + $0x340] sm:$0xf]
    %v282 = vld [vmem:[#allocation5 + $0x344] sm:$0xf]
    %v283 = vld [vmem:[#allocation5 + $0x348] sm:$0xf]
    %v284 = vld [vmem:[#allocation5 + $0x34c] sm:$0xf]
    %v285 = vld [vmem:[#allocation5 + $0x350] sm:$0xf]
    %v286 = vld [vmem:[#allocation5 + $0x354] sm:$0xf]
    %v287 = vld [vmem:[#allocation5 + $0x358] sm:$0xf]
    %v288 = vld [vmem:[#allocation5 + $0x35c] sm:$0xf]
    %v289 = vld [vmem:[#allocation5 + $0x360] sm:$0xf]
    %v290 = vld [vmem:[#allocation5 + $0x364] sm:$0xf]
    %v291 = vld [vmem:[#allocation5 + $0x368] sm:$0xf]
    %v292 = vld [vmem:[#allocation5 + $0x36c] sm:$0xf]
    %v293 = vld [vmem:[#allocation5 + $0x370] sm:$0xf]
    %v294 = vld [vmem:[#allocation5 + $0x374] sm:$0xf]
    %v295 = vld [vmem:[#allocation5 + $0x378] sm:$0xf]
    %v296 = vld [vmem:[#allocation5 + $0x37c] sm:$0xf]
    %v297 = vld [vmem:[#allocation5 + $0x380] sm:$0xf]
    %v298 = vld [vmem:[#allocation5 + $0x384] sm:$0xf]
    %v299 = vld [vmem:[#allocation5 + $0x388] sm:$0xf]
    %v300 = vld [vmem:[#allocation5 + $0x38c] sm:$0xf]
    %v301 = vld [vmem:[#allocation5 + $0x390] sm:$0xf]
    %v302 = vld [vmem:[#allocation5 + $0x394] sm:$0xf]
    %v303 = vld [vmem:[#allocation5 + $0x398] sm:$0xf]
    %v304 = vld [vmem:[#allocation5 + $0x39c] sm:$0xf]
    %v305 = vld [vmem:[#allocation5 + $0x3a0] sm:$0xf]
    %v306 = vld [vmem:[#allocation5 + $0x3a4] sm:$0xf]
    %v307 = vld [vmem:[#allocation5 + $0x3a8] sm:$0xf]
    %v308 = vld [vmem:[#allocation5 + $0x3ac] sm:$0xf]
    %v309 = vld [vmem:[#allocation5 + $0x3b0] sm:$0xf]
    %v310 = vld [vmem:[#allocation5 + $0x3b4] sm:$0xf]
    %v311 = vld [vmem:[#allocation5 + $0x3b8] sm:$0xf]
    %v312 = vld [vmem:[#allocation5 + $0x3bc] sm:$0xf]
    %v313 = vld [vmem:[#allocation5 + $0x3c0] sm:$0xf]
    %v314 = vld [vmem:[#allocation5 + $0x3c4] sm:$0xf]
    %v315 = vld [vmem:[#allocation5 + $0x3c8] sm:$0xf]
    %v316 = vld [vmem:[#allocation5 + $0x3cc] sm:$0xf]
    %v317 = vld [vmem:[#allocation5 + $0x3d0] sm:$0xf]
    %v318 = vld [vmem:[#allocation5 + $0x3d4] sm:$0xf]
    %v319 = vld [vmem:[#allocation5 + $0x3d8] sm:$0xf]
    %v320 = vld [vmem:[#allocation5 + $0x3dc] sm:$0xf]
    %v321 = vld [vmem:[#allocation5 + $0x3e0] sm:$0xf]
    %v322 = vld [vmem:[#allocation5 + $0x3e4] sm:$0xf]
    %v323 = vld [vmem:[#allocation5 + $0x3e8] sm:$0xf]
    %v324 = vld [vmem:[#allocation5 + $0x3ec] sm:$0xf]
    %v325 = vld [vmem:[#allocation5 + $0x3f0] sm:$0xf]
    %v326 = vld [vmem:[#allocation5 + $0x3f4] sm:$0xf]
    %v327 = vld [vmem:[#allocation5 + $0x3f8] sm:$0xf]
    %v328 = vld [vmem:[#allocation5 + $0x3fc] sm:$0xf]
    %v329 = vld [vmem:[#allocation5 + $0x400] sm:$0xf]
    %v330 = vld [vmem:[#allocation5 + $0x404] sm:$0xf]
    %v331 = vld [vmem:[#allocation5 + $0x408] sm:$0xf]
    %v332 = vld [vmem:[#allocation5 + $0x40c] sm:$0xf]
    %v333 = vld [vmem:[#allocation5 + $0x410] sm:$0xf]
    %v334 = vld [vmem:[#allocation5 + $0x414] sm:$0xf]
    %v335 = vld [vmem:[#allocation5 + $0x418] sm:$0xf]
    %v336 = vld [vmem:[#allocation5 + $0x41c] sm:$0xf]
    %v337 = vld [vmem:[#allocation5 + $0x420] sm:$0xf]
    %v338 = vld [vmem:[#allocation5 + $0x424] sm:$0xf]
    %v339 = vld [vmem:[#allocation5 + $0x428] sm:$0xf]
    %v340 = vld [vmem:[#allocation5 + $0x42c] sm:$0xf]
    %v341 = vld [vmem:[#allocation5 + $0x430] sm:$0xf]
    %v342 = vld [vmem:[#allocation5 + $0x434] sm:$0xf]
    %v343 = vld [vmem:[#allocation5 + $0x438] sm:$0xf]
    %v344 = vld [vmem:[#allocation5 + $0x43c] sm:$0xf]
    %v345 = vld [vmem:[#allocation5 + $0x440] sm:$0xf]
    %v346 = vld [vmem:[#allocation5 + $0x444] sm:$0xf]
    %v347 = vld [vmem:[#allocation5 + $0x448] sm:$0xf]
    %v348 = vld [vmem:[#allocation5 + $0x44c] sm:$0xf]
    %v349 = vld [vmem:[#allocation5 + $0x450] sm:$0xf]
    %v350 = vld [vmem:[#allocation5 + $0x454] sm:$0xf]
    %v351 = vld [vmem:[#allocation5 + $0x458] sm:$0xf]
    %v352 = vld [vmem:[#allocation5 + $0x45c] sm:$0xf]
    %v353 = vld [vmem:[#allocation5 + $0x460] sm:$0xf]
    %v354 = vld [vmem:[#allocation5 + $0x464] sm:$0xf]
    %v355 = vld [vmem:[#allocation5 + $0x468] sm:$0xf]
    %v356 = vld [vmem:[#allocation5 + $0x46c] sm:$0xf]
    %v357 = vld [vmem:[#allocation5 + $0x470] sm:$0xf]
    %v358 = vld [vmem:[#allocation5 + $0x474] sm:$0xf]
    %v359 = vld [vmem:[#allocation5 + $0x478] sm:$0xf]
    %v360 = vld [vmem:[#allocation5 + $0x47c] sm:$0xf]
    %v361 = vld [vmem:[#allocation5 + $0x480] sm:$0xf]
    %v362 = vld [vmem:[#allocation5 + $0x484] sm:$0xf]
    %v363 = vld [vmem:[#allocation5 + $0x488] sm:$0xf]
    %v364 = vld [vmem:[#allocation5 + $0x48c] sm:$0xf]
    %v365 = vld [vmem:[#allocation5 + $0x490] sm:$0xf]
    %v366 = vld [vmem:[#allocation5 + $0x494] sm:$0xf]
    %v367 = vld [vmem:[#allocation5 + $0x498] sm:$0xf]
    %v368 = vld [vmem:[#allocation5 + $0x49c] sm:$0xf]
    %v369 = vld [vmem:[#allocation5 + $0x4a0] sm:$0xf]
    %v370 = vld [vmem:[#allocation5 + $0x4a4] sm:$0xf]
    %v371 = vld [vmem:[#allocation5 + $0x4a8] sm:$0xf]
    %v372 = vld [vmem:[#allocation5 + $0x4ac] sm:$0xf]
    %v373 = vld [vmem:[#allocation5 + $0x4b0] sm:$0xf]
    %v374 = vld [vmem:[#allocation5 + $0x4b4] sm:$0xf]
    %v375 = vld [vmem:[#allocation5 + $0x4b8] sm:$0xf]
    %v376 = vld [vmem:[#allocation5 + $0x4bc] sm:$0xf]
    %v377 = vld [vmem:[#allocation5 + $0x4c0] sm:$0xf]
    %v378 = vld [vmem:[#allocation5 + $0x4c4] sm:$0xf]
    %v379 = vld [vmem:[#allocation5 + $0x4c8] sm:$0xf]
    %v380 = vld [vmem:[#allocation5 + $0x4cc] sm:$0xf]
    %v381 = vld [vmem:[#allocation5 + $0x4d0] sm:$0xf]
    %v382 = vld [vmem:[#allocation5 + $0x4d4] sm:$0xf]
    %v383 = vld [vmem:[#allocation5 + $0x4d8] sm:$0xf]
    %v384 = vld [vmem:[#allocation5 + $0x4dc] sm:$0xf]
    %v385 = vld [vmem:[#allocation5 + $0x4e0] sm:$0xf]
    %v386 = vld [vmem:[#allocation5 + $0x4e4] sm:$0xf]
    %v387 = vld [vmem:[#allocation5 + $0x4e8] sm:$0xf]
    %v388 = vld [vmem:[#allocation5 + $0x4ec] sm:$0xf]
    %v389 = vld [vmem:[#allocation5 + $0x4f0] sm:$0xf]
    %v390 = vld [vmem:[#allocation5 + $0x4f4] sm:$0xf]
    %v391 = vld [vmem:[#allocation5 + $0x4f8] sm:$0xf]
    %v392 = vld [vmem:[#allocation5 + $0x4fc] sm:$0xf]
    %v393 = vld [vmem:[#allocation5 + $0x500] sm:$0xf]
    %v394 = vld [vmem:[#allocation5 + $0x504] sm:$0xf]
    %v395 = vld [vmem:[#allocation5 + $0x508] sm:$0xf]
    %v396 = vld [vmem:[#allocation5 + $0x50c] sm:$0xf]
    %v397 = vld [vmem:[#allocation5 + $0x510] sm:$0xf]
    %v398 = vld [vmem:[#allocation5 + $0x514] sm:$0xf]
    %v399 = vld [vmem:[#allocation5 + $0x518] sm:$0xf]
    %v400 = vld [vmem:[#allocation5 + $0x51c] sm:$0xf]
    %v401 = vld [vmem:[#allocation5 + $0x520] sm:$0xf]
    %v402 = vld [vmem:[#allocation5 + $0x524] sm:$0xf]
    %v403 = vld [vmem:[#allocation5 + $0x528] sm:$0xf]
    %v404 = vld [vmem:[#allocation5 + $0x52c] sm:$0xf]
    %v405 = vld [vmem:[#allocation5 + $0x530] sm:$0xf]
    %v406 = vld [vmem:[#allocation5 + $0x534] sm:$0xf]
    %v407 = vld [vmem:[#allocation5 + $0x538] sm:$0xf]
    %v408 = vld [vmem:[#allocation5 + $0x53c] sm:$0xf]
    %v409 = vld [vmem:[#allocation5 + $0x540] sm:$0xf]
    %v410 = vld [vmem:[#allocation5 + $0x544] sm:$0xf]
    %v411 = vld [vmem:[#allocation5 + $0x548] sm:$0xf]
    %v412 = vld [vmem:[#allocation5 + $0x54c] sm:$0xf]
    %v413 = vld [vmem:[#allocation5 + $0x550] sm:$0xf]
    %v414 = vld [vmem:[#allocation5 + $0x554] sm:$0xf]
    %v415 = vld [vmem:[#allocation5 + $0x558] sm:$0xf]
    %v416 = vld [vmem:[#allocation5 + $0x55c] sm:$0xf]
    %v417 = vld [vmem:[#allocation5 + $0x560] sm:$0xf]
    %v418 = vld [vmem:[#allocation5 + $0x564] sm:$0xf]
    %v419 = vld [vmem:[#allocation5 + $0x568] sm:$0xf]
    %v420 = vld [vmem:[#allocation5 + $0x56c] sm:$0xf]
    %v421 = vld [vmem:[#allocation5 + $0x570] sm:$0xf]
    %v422 = vld [vmem:[#allocation5 + $0x574] sm:$0xf]
    %v423 = vld [vmem:[#allocation5 + $0x578] sm:$0xf]
    %v424 = vld [vmem:[#allocation5 + $0x57c] sm:$0xf]
    %v425 = vld [vmem:[#allocation5 + $0x580] sm:$0xf]
    %v426 = vld [vmem:[#allocation5 + $0x584] sm:$0xf]
    %v427 = vld [vmem:[#allocation5 + $0x588] sm:$0xf]
    %v428 = vld [vmem:[#allocation5 + $0x58c] sm:$0xf]
    %v429 = vld [vmem:[#allocation5 + $0x590] sm:$0xf]
    %v430 = vld [vmem:[#allocation5 + $0x594] sm:$0xf]
    %v431 = vld [vmem:[#allocation5 + $0x598] sm:$0xf]
    %v432 = vld [vmem:[#allocation5 + $0x59c] sm:$0xf]
    %v433 = vld [vmem:[#allocation5 + $0x5a0] sm:$0xf]
    %v434 = vld [vmem:[#allocation5 + $0x5a4] sm:$0xf]
    %v435 = vld [vmem:[#allocation5 + $0x5a8] sm:$0xf]
    %v436 = vld [vmem:[#allocation5 + $0x5ac] sm:$0xf]
    %v437 = vld [vmem:[#allocation5 + $0x5b0] sm:$0xf]
    %v438 = vld [vmem:[#allocation5 + $0x5b4] sm:$0xf]
    %v439 = vld [vmem:[#allocation5 + $0x5b8] sm:$0xf]
    %v440 = vld [vmem:[#allocation5 + $0x5bc] sm:$0xf]
    %v441 = vld [vmem:[#allocation5 + $0x5c0] sm:$0xf]
    %v442 = vld [vmem:[#allocation5 + $0x5c4] sm:$0xf]
    %v443 = vld [vmem:[#allocation5 + $0x5c8] sm:$0xf]
    %v444 = vld [vmem:[#allocation5 + $0x5cc] sm:$0xf]
    %v445 = vld [vmem:[#allocation5 + $0x5d0] sm:$0xf]
    %v446 = vld [vmem:[#allocation5 + $0x5d4] sm:$0xf]
    %v447 = vld [vmem:[#allocation5 + $0x5d8] sm:$0xf]
    %v448 = vld [vmem:[#allocation5 + $0x5dc] sm:$0xf]
    %v449 = vld [vmem:[#allocation5 + $0x5e0] sm:$0xf]
    %v450 = vld [vmem:[#allocation5 + $0x5e4] sm:$0xf]
    %v451 = vld [vmem:[#allocation5 + $0x5e8] sm:$0xf]
    %v452 = vld [vmem:[#allocation5 + $0x5ec] sm:$0xf]
    %v453 = vld [vmem:[#allocation5 + $0x5f0] sm:$0xf]
    %v454 = vld [vmem:[#allocation5 + $0x5f4] sm:$0xf]
    %v455 = vld [vmem:[#allocation5 + $0x5f8] sm:$0xf]
    %v456 = vld [vmem:[#allocation5 + $0x5fc] sm:$0xf]
    %v457 = vld [vmem:[%s2] sm:$0x1]
    %v459 = vlaneseq
    %v460 = vshrl.u32 %v459, 7
    %v461 = vsub.s32 0, %v460
    %v462 = vrot.slane %v457, %v461
    %v476 = vunpack.c.l.b16 %v61
    %v477 = vunpack.c.h.b16 %v61
    %v478 = vunpack.c.l.b16 %v62
    %v479 = vunpack.c.h.b16 %v62
    %v480 = vunpack.c.l.b16 %v63
    %v481 = vunpack.c.h.b16 %v63
    %v482 = vunpack.c.l.b16 %v64
    %v483 = vunpack.c.h.b16 %v64
    %v484 = vunpack.c.l.b16 %v65
    %v485 = vunpack.c.h.b16 %v65
    %v486 = vunpack.c.l.b16 %v66
    %v487 = vunpack.c.h.b16 %v66
    %v488 = vunpack.c.l.b16 %v67
    %v489 = vunpack.c.h.b16 %v67
    %v490 = vunpack.c.l.b16 %v68
    %v491 = vunpack.c.h.b16 %v68
    %v492 = vunpack.c.l.b16 %v69
    %v493 = vunpack.c.h.b16 %v69
    %v494 = vunpack.c.l.b16 %v70
    %v495 = vunpack.c.h.b16 %v70
    %v496 = vunpack.c.l.b16 %v71
    %v497 = vunpack.c.h.b16 %v71
    %v498 = vunpack.c.l.b16 %v72
    %v499 = vunpack.c.h.b16 %v72
    %v500 = vpack.c.b16 %v476, %v476
    %v501 = vpack.c.b16 %v477, %v477
    %v502 = vpack.c.b16 %v478, %v478
    %v503 = vpack.c.b16 %v479, %v479
    %v504 = vpack.c.b16 %v480, %v480
    %v505 = vpack.c.b16 %v481, %v481
    %v506 = vpack.c.b16 %v482, %v482
    %v507 = vpack.c.b16 %v483, %v483
    %v508 = vpack.c.b16 %v484, %v484
    %v509 = vpack.c.b16 %v485, %v485
    %v510 = vpack.c.b16 %v486, %v486
    %v511 = vpack.c.b16 %v487, %v487
    %v512 = vpack.c.b16 %v488, %v488
    %v513 = vpack.c.b16 %v489, %v489
    %v514 = vpack.c.b16 %v490, %v490
    %v515 = vpack.c.b16 %v491, %v491
    %v516 = vpack.c.b16 %v492, %v492
    %v517 = vpack.c.b16 %v493, %v493
    %v518 = vpack.c.b16 %v494, %v494
    %v519 = vpack.c.b16 %v495, %v495
    %v520 = vpack.c.b16 %v496, %v496
    %v521 = vpack.c.b16 %v497, %v497
    %v522 = vpack.c.b16 %v498, %v498
    %v523 = vpack.c.b16 %v499, %v499
    %v932 = vunpack.c.l.b16 %v73
    %v933 = vunpack.c.l.b16 %v74
    %v934 = vunpack.c.l.b16 %v75
    %v935 = vunpack.c.l.b16 %v76
    %v936 = vunpack.c.l.b16 %v77
    %v937 = vunpack.c.l.b16 %v78
    %v938 = vunpack.c.l.b16 %v79
    %v939 = vunpack.c.l.b16 %v80
    %v940 = vunpack.c.l.b16 %v81
    %v941 = vunpack.c.l.b16 %v82
    %v942 = vunpack.c.l.b16 %v83
    %v943 = vunpack.c.l.b16 %v84
    %v944 = vunpack.c.l.b16 %v85
    %v945 = vunpack.c.l.b16 %v86
    %v946 = vunpack.c.l.b16 %v87
    %v947 = vunpack.c.l.b16 %v88
    %v948 = vunpack.c.l.b16 %v89
    %v949 = vunpack.c.l.b16 %v90
    %v950 = vunpack.c.l.b16 %v91
    %v951 = vunpack.c.l.b16 %v92
    %v952 = vunpack.c.l.b16 %v93
    %v953 = vunpack.c.l.b16 %v94
    %v954 = vunpack.c.l.b16 %v95
    %v955 = vunpack.c.l.b16 %v96
    %v956 = vunpack.c.l.b16 %v97
    %v957 = vunpack.c.l.b16 %v98
    %v958 = vunpack.c.l.b16 %v99
    %v959 = vunpack.c.l.b16 %v100
    %v960 = vunpack.c.l.b16 %v101
    %v961 = vunpack.c.l.b16 %v102
    %v962 = vunpack.c.l.b16 %v103
    %v963 = vunpack.c.l.b16 %v104
    %v964 = vunpack.c.l.b16 %v105
    %v965 = vunpack.c.l.b16 %v106
    %v966 = vunpack.c.l.b16 %v107
    %v967 = vunpack.c.l.b16 %v108
    %v968 = vunpack.c.l.b16 %v109
    %v969 = vunpack.c.l.b16 %v110
    %v970 = vunpack.c.l.b16 %v111
    %v971 = vunpack.c.l.b16 %v112
    %v972 = vunpack.c.l.b16 %v113
    %v973 = vunpack.c.l.b16 %v114
    %v974 = vunpack.c.l.b16 %v115
    %v975 = vunpack.c.l.b16 %v116
    %v976 = vunpack.c.l.b16 %v117
    %v977 = vunpack.c.l.b16 %v118
    %v978 = vunpack.c.l.b16 %v119
    %v979 = vunpack.c.l.b16 %v120
    %v980 = vunpack.c.l.b16 %v121
    %v981 = vunpack.c.l.b16 %v122
    %v982 = vunpack.c.l.b16 %v123
    %v983 = vunpack.c.l.b16 %v124
    %v984 = vunpack.c.l.b16 %v125
    %v985 = vunpack.c.l.b16 %v126
    %v986 = vunpack.c.l.b16 %v127
    %v987 = vunpack.c.l.b16 %v128
    %v988 = vunpack.c.l.b16 %v129
    %v989 = vunpack.c.l.b16 %v130
    %v990 = vunpack.c.l.b16 %v131
    %v991 = vunpack.c.l.b16 %v132
    %v992 = vunpack.c.l.b16 %v133
    %v993 = vunpack.c.l.b16 %v134
    %v994 = vunpack.c.l.b16 %v135
    %v995 = vunpack.c.l.b16 %v136
    %v996 = vunpack.c.l.b16 %v137
    %v997 = vunpack.c.l.b16 %v138
    %v998 = vunpack.c.l.b16 %v139
    %v999 = vunpack.c.l.b16 %v140
    %v1000 = vunpack.c.l.b16 %v141
    %v1001 = vunpack.c.l.b16 %v142
    %v1002 = vunpack.c.l.b16 %v143
    %v1003 = vunpack.c.l.b16 %v144
    %v1004 = vunpack.c.l.b16 %v145
    %v1005 = vunpack.c.l.b16 %v146
    %v1006 = vunpack.c.l.b16 %v147
    %v1007 = vunpack.c.l.b16 %v148
    %v1008 = vunpack.c.l.b16 %v149
    %v1009 = vunpack.c.l.b16 %v150
    %v1010 = vunpack.c.l.b16 %v151
    %v1011 = vunpack.c.l.b16 %v152
    %v1012 = vunpack.c.l.b16 %v153
    %v1013 = vunpack.c.l.b16 %v154
    %v1014 = vunpack.c.l.b16 %v155
    %v1015 = vunpack.c.l.b16 %v156
    %v1016 = vunpack.c.l.b16 %v157
    %v1017 = vunpack.c.l.b16 %v158
    %v1018 = vunpack.c.l.b16 %v159
    %v1019 = vunpack.c.l.b16 %v160
    %v1020 = vunpack.c.l.b16 %v161
    %v1021 = vunpack.c.l.b16 %v162
    %v1022 = vunpack.c.l.b16 %v163
    %v1023 = vunpack.c.l.b16 %v164
    %v1024 = vunpack.c.l.b16 %v165
    %v1025 = vunpack.c.l.b16 %v166
    %v1026 = vunpack.c.l.b16 %v167
    %v1027 = vunpack.c.l.b16 %v168
    %v1028 = vunpack.c.l.b16 %v169
    %v1029 = vunpack.c.l.b16 %v170
    %v1030 = vunpack.c.l.b16 %v171
    %v1031 = vunpack.c.l.b16 %v172
    %v1032 = vunpack.c.l.b16 %v173
    %v1033 = vunpack.c.l.b16 %v174
    %v1034 = vunpack.c.l.b16 %v175
    %v1035 = vunpack.c.l.b16 %v176
    %v1036 = vunpack.c.l.b16 %v177
    %v1037 = vunpack.c.l.b16 %v178
    %v1038 = vunpack.c.l.b16 %v179
    %v1039 = vunpack.c.l.b16 %v180
    %v1040 = vunpack.c.l.b16 %v181
    %v1041 = vunpack.c.l.b16 %v182
    %v1042 = vunpack.c.l.b16 %v183
    %v1043 = vunpack.c.l.b16 %v184
    %v1044 = vunpack.c.l.b16 %v185
    %v1045 = vunpack.c.l.b16 %v186
    %v1046 = vunpack.c.l.b16 %v187
    %v1047 = vunpack.c.l.b16 %v188
    %v1048 = vunpack.c.l.b16 %v189
    %v1049 = vunpack.c.l.b16 %v190
    %v1050 = vunpack.c.l.b16 %v191
    %v1051 = vunpack.c.l.b16 %v192
    %v1052 = vunpack.c.l.b16 %v193
    %v1053 = vunpack.c.l.b16 %v194
    %v1054 = vunpack.c.l.b16 %v195
    %v1055 = vunpack.c.l.b16 %v196
    %v1056 = vunpack.c.l.b16 %v197
    %v1057 = vunpack.c.l.b16 %v198
    %v1058 = vunpack.c.l.b16 %v199
    %v1059 = vunpack.c.l.b16 %v200
    %v1060 = vunpack.c.l.b16 %v201
    %v1061 = vunpack.c.l.b16 %v202
    %v1062 = vunpack.c.l.b16 %v203
    %v1063 = vunpack.c.l.b16 %v204
    %v1064 = vunpack.c.l.b16 %v205
    %v1065 = vunpack.c.l.b16 %v206
    %v1066 = vunpack.c.l.b16 %v207
    %v1067 = vunpack.c.l.b16 %v208
    %v1068 = vunpack.c.l.b16 %v209
    %v1069 = vunpack.c.l.b16 %v210
    %v1070 = vunpack.c.l.b16 %v211
    %v1071 = vunpack.c.l.b16 %v212
    %v1072 = vunpack.c.l.b16 %v213
    %v1073 = vunpack.c.l.b16 %v214
    %v1074 = vunpack.c.l.b16 %v215
    %v1075 = vunpack.c.l.b16 %v216
    %v1076 = vunpack.c.l.b16 %v217
    %v1077 = vunpack.c.l.b16 %v218
    %v1078 = vunpack.c.l.b16 %v219
    %v1079 = vunpack.c.l.b16 %v220
    %v1080 = vunpack.c.l.b16 %v221
    %v1081 = vunpack.c.l.b16 %v222
    %v1082 = vunpack.c.l.b16 %v223
    %v1083 = vunpack.c.l.b16 %v224
    %v1084 = vunpack.c.l.b16 %v225
    %v1085 = vunpack.c.l.b16 %v226
    %v1086 = vunpack.c.l.b16 %v227
    %v1087 = vunpack.c.l.b16 %v228
    %v1088 = vunpack.c.l.b16 %v229
    %v1089 = vunpack.c.l.b16 %v230
    %v1090 = vunpack.c.l.b16 %v231
    %v1091 = vunpack.c.l.b16 %v232
    %v1092 = vunpack.c.l.b16 %v233
    %v1093 = vunpack.c.l.b16 %v234
    %v1094 = vunpack.c.l.b16 %v235
    %v1095 = vunpack.c.l.b16 %v236
    %v1096 = vunpack.c.l.b16 %v237
    %v1097 = vunpack.c.l.b16 %v238
    %v1098 = vunpack.c.l.b16 %v239
    %v1099 = vunpack.c.l.b16 %v240
    %v1100 = vunpack.c.l.b16 %v241
    %v1101 = vunpack.c.l.b16 %v242
    %v1102 = vunpack.c.l.b16 %v243
    %v1103 = vunpack.c.l.b16 %v244
    %v1104 = vunpack.c.l.b16 %v245
    %v1105 = vunpack.c.l.b16 %v246
    %v1106 = vunpack.c.l.b16 %v247
    %v1107 = vunpack.c.l.b16 %v248
    %v1108 = vunpack.c.l.b16 %v249
    %v1109 = vunpack.c.l.b16 %v250
    %v1110 = vunpack.c.l.b16 %v251
    %v1111 = vunpack.c.l.b16 %v252
    %v1112 = vunpack.c.l.b16 %v253
    %v1113 = vunpack.c.l.b16 %v254
    %v1114 = vunpack.c.l.b16 %v255
    %v1115 = vunpack.c.l.b16 %v256
    %v1116 = vunpack.c.l.b16 %v257
    %v1117 = vunpack.c.l.b16 %v258
    %v1118 = vunpack.c.l.b16 %v259
    %v1119 = vunpack.c.l.b16 %v260
    %v1120 = vunpack.c.l.b16 %v261
    %v1121 = vunpack.c.l.b16 %v262
    %v1122 = vunpack.c.l.b16 %v263
    %v1123 = vunpack.c.l.b16 %v264
    %v1124 = vunpack.c.l.b16 %v265
    %v1125 = vunpack.c.l.b16 %v266
    %v1126 = vunpack.c.l.b16 %v267
    %v1127 = vunpack.c.l.b16 %v268
    %v1128 = vunpack.c.l.b16 %v269
    %v1129 = vunpack.c.l.b16 %v270
    %v1130 = vunpack.c.l.b16 %v271
    %v1131 = vunpack.c.l.b16 %v272
    %v1132 = vunpack.c.l.b16 %v273
    %v1133 = vunpack.c.l.b16 %v274
    %v1134 = vunpack.c.l.b16 %v275
    %v1135 = vunpack.c.l.b16 %v276
    %v1136 = vunpack.c.l.b16 %v277
    %v1137 = vunpack.c.l.b16 %v278
    %v1138 = vunpack.c.l.b16 %v279
    %v1139 = vunpack.c.l.b16 %v280
    %v1140 = vunpack.c.l.b16 %v281
    %v1141 = vunpack.c.l.b16 %v282
    %v1142 = vunpack.c.l.b16 %v283
    %v1143 = vunpack.c.l.b16 %v284
    %v1144 = vunpack.c.l.b16 %v285
    %v1145 = vunpack.c.l.b16 %v286
    %v1146 = vunpack.c.l.b16 %v287
    %v1147 = vunpack.c.l.b16 %v288
    %v1148 = vunpack.c.l.b16 %v289
    %v1149 = vunpack.c.l.b16 %v290
    %v1150 = vunpack.c.l.b16 %v291
    %v1151 = vunpack.c.l.b16 %v292
    %v1152 = vunpack.c.l.b16 %v293
    %v1153 = vunpack.c.l.b16 %v294
    %v1154 = vunpack.c.l.b16 %v295
    %v1155 = vunpack.c.l.b16 %v296
    %v1156 = vunpack.c.l.b16 %v297
    %v1157 = vunpack.c.l.b16 %v298
    %v1158 = vunpack.c.l.b16 %v299
    %v1159 = vunpack.c.l.b16 %v300
    %v1160 = vunpack.c.l.b16 %v301
    %v1161 = vunpack.c.l.b16 %v302
    %v1162 = vunpack.c.l.b16 %v303
    %v1163 = vunpack.c.l.b16 %v304
    %v1164 = vunpack.c.l.b16 %v305
    %v1165 = vunpack.c.l.b16 %v306
    %v1166 = vunpack.c.l.b16 %v307
    %v1167 = vunpack.c.l.b16 %v308
    %v1168 = vunpack.c.l.b16 %v309
    %v1169 = vunpack.c.l.b16 %v310
    %v1170 = vunpack.c.l.b16 %v311
    %v1171 = vunpack.c.l.b16 %v312
    %v1172 = vunpack.c.l.b16 %v313
    %v1173 = vunpack.c.l.b16 %v314
    %v1174 = vunpack.c.l.b16 %v315
    %v1175 = vunpack.c.l.b16 %v316
    %v1176 = vunpack.c.l.b16 %v317
    %v1177 = vunpack.c.l.b16 %v318
    %v1178 = vunpack.c.l.b16 %v319
    %v1179 = vunpack.c.l.b16 %v320
    %v1180 = vunpack.c.l.b16 %v321
    %v1181 = vunpack.c.l.b16 %v322
    %v1182 = vunpack.c.l.b16 %v323
    %v1183 = vunpack.c.l.b16 %v324
    %v1184 = vunpack.c.l.b16 %v325
    %v1185 = vunpack.c.l.b16 %v326
    %v1186 = vunpack.c.l.b16 %v327
    %v1187 = vunpack.c.l.b16 %v328
    %v1188 = vunpack.c.l.b16 %v329
    %v1189 = vunpack.c.l.b16 %v330
    %v1190 = vunpack.c.l.b16 %v331
    %v1191 = vunpack.c.l.b16 %v332
    %v1192 = vunpack.c.l.b16 %v333
    %v1193 = vunpack.c.l.b16 %v334
    %v1194 = vunpack.c.l.b16 %v335
    %v1195 = vunpack.c.l.b16 %v336
    %v1196 = vunpack.c.l.b16 %v337
    %v1197 = vunpack.c.l.b16 %v338
    %v1198 = vunpack.c.l.b16 %v339
    %v1199 = vunpack.c.l.b16 %v340
    %v1200 = vunpack.c.l.b16 %v341
    %v1201 = vunpack.c.l.b16 %v342
    %v1202 = vunpack.c.l.b16 %v343
    %v1203 = vunpack.c.l.b16 %v344
    %v1204 = vunpack.c.l.b16 %v345
    %v1205 = vunpack.c.l.b16 %v346
    %v1206 = vunpack.c.l.b16 %v347
    %v1207 = vunpack.c.l.b16 %v348
    %v1208 = vunpack.c.l.b16 %v349
    %v1209 = vunpack.c.l.b16 %v350
    %v1210 = vunpack.c.l.b16 %v351
    %v1211 = vunpack.c.l.b16 %v352
    %v1212 = vunpack.c.l.b16 %v353
    %v1213 = vunpack.c.l.b16 %v354
    %v1214 = vunpack.c.l.b16 %v355
    %v1215 = vunpack.c.l.b16 %v356
    %v1216 = vunpack.c.l.b16 %v357
    %v1217 = vunpack.c.l.b16 %v358
    %v1218 = vunpack.c.l.b16 %v359
    %v1219 = vunpack.c.l.b16 %v360
    %v1220 = vunpack.c.l.b16 %v361
    %v1221 = vunpack.c.l.b16 %v362
    %v1222 = vunpack.c.l.b16 %v363
    %v1223 = vunpack.c.l.b16 %v364
    %v1224 = vunpack.c.l.b16 %v365
    %v1225 = vunpack.c.l.b16 %v366
    %v1226 = vunpack.c.l.b16 %v367
    %v1227 = vunpack.c.l.b16 %v368
    %v1228 = vunpack.c.l.b16 %v369
    %v1229 = vunpack.c.l.b16 %v370
    %v1230 = vunpack.c.l.b16 %v371
    %v1231 = vunpack.c.l.b16 %v372
    %v1232 = vunpack.c.l.b16 %v373
    %v1233 = vunpack.c.l.b16 %v374
    %v1234 = vunpack.c.l.b16 %v375
    %v1235 = vunpack.c.l.b16 %v376
    %v1236 = vunpack.c.l.b16 %v377
    %v1237 = vunpack.c.l.b16 %v378
    %v1238 = vunpack.c.l.b16 %v379
    %v1239 = vunpack.c.l.b16 %v380
    %v1240 = vunpack.c.l.b16 %v381
    %v1241 = vunpack.c.l.b16 %v382
    %v1242 = vunpack.c.l.b16 %v383
    %v1243 = vunpack.c.l.b16 %v384
    %v1244 = vunpack.c.l.b16 %v385
    %v1245 = vunpack.c.l.b16 %v386
    %v1246 = vunpack.c.l.b16 %v387
    %v1247 = vunpack.c.l.b16 %v388
    %v1248 = vunpack.c.l.b16 %v389
    %v1249 = vunpack.c.l.b16 %v390
    %v1250 = vunpack.c.l.b16 %v391
    %v1251 = vunpack.c.l.b16 %v392
    %v1252 = vunpack.c.l.b16 %v393
    %v1253 = vunpack.c.l.b16 %v394
    %v1254 = vunpack.c.l.b16 %v395
    %v1255 = vunpack.c.l.b16 %v396
    %v1256 = vunpack.c.l.b16 %v397
    %v1257 = vunpack.c.l.b16 %v398
    %v1258 = vunpack.c.l.b16 %v399
    %v1259 = vunpack.c.l.b16 %v400
    %v1260 = vunpack.c.l.b16 %v401
    %v1261 = vunpack.c.l.b16 %v402
    %v1262 = vunpack.c.l.b16 %v403
    %v1263 = vunpack.c.l.b16 %v404
    %v1264 = vunpack.c.l.b16 %v405
    %v1265 = vunpack.c.l.b16 %v406
    %v1266 = vunpack.c.l.b16 %v407
    %v1267 = vunpack.c.l.b16 %v408
    %v1268 = vunpack.c.l.b16 %v409
    %v1269 = vunpack.c.l.b16 %v410
    %v1270 = vunpack.c.l.b16 %v411
    %v1271 = vunpack.c.l.b16 %v412
    %v1272 = vunpack.c.l.b16 %v413
    %v1273 = vunpack.c.l.b16 %v414
    %v1274 = vunpack.c.l.b16 %v415
    %v1275 = vunpack.c.l.b16 %v416
    %v1276 = vunpack.c.l.b16 %v417
    %v1277 = vunpack.c.l.b16 %v418
    %v1278 = vunpack.c.l.b16 %v419
    %v1279 = vunpack.c.l.b16 %v420
    %v1280 = vunpack.c.l.b16 %v421
    %v1281 = vunpack.c.l.b16 %v422
    %v1282 = vunpack.c.l.b16 %v423
    %v1283 = vunpack.c.l.b16 %v424
    %v1284 = vunpack.c.l.b16 %v425
    %v1285 = vunpack.c.l.b16 %v426
    %v1286 = vunpack.c.l.b16 %v427
    %v1287 = vunpack.c.l.b16 %v428
    %v1288 = vunpack.c.l.b16 %v429
    %v1289 = vunpack.c.l.b16 %v430
    %v1290 = vunpack.c.l.b16 %v431
    %v1291 = vunpack.c.l.b16 %v432
    %v1292 = vunpack.c.l.b16 %v433
    %v1293 = vunpack.c.l.b16 %v434
    %v1294 = vunpack.c.l.b16 %v435
    %v1295 = vunpack.c.l.b16 %v436
    %v1296 = vunpack.c.l.b16 %v437
    %v1297 = vunpack.c.l.b16 %v438
    %v1298 = vunpack.c.l.b16 %v439
    %v1299 = vunpack.c.l.b16 %v440
    %v1300 = vunpack.c.l.b16 %v441
    %v1301 = vunpack.c.l.b16 %v442
    %v1302 = vunpack.c.l.b16 %v443
    %v1303 = vunpack.c.l.b16 %v444
    %v1304 = vunpack.c.l.b16 %v445
    %v1305 = vunpack.c.l.b16 %v446
    %v1306 = vunpack.c.l.b16 %v447
    %v1307 = vunpack.c.l.b16 %v448
    %v1308 = vunpack.c.l.b16 %v449
    %v1309 = vunpack.c.l.b16 %v450
    %v1310 = vunpack.c.l.b16 %v451
    %v1311 = vunpack.c.l.b16 %v452
    %v1312 = vunpack.c.l.b16 %v453
    %v1313 = vunpack.c.l.b16 %v454
    %v1314 = vunpack.c.l.b16 %v455
    %v1315 = vunpack.c.l.b16 %v456
    %v1316 = vpack.c.b16 %v933, %v932
    %v1317 = vpack.c.b16 %v935, %v934
    %v1318 = vpack.c.b16 %v937, %v936
    %v1319 = vpack.c.b16 %v939, %v938
    %v1320 = vpack.c.b16 %v941, %v940
    %v1321 = vpack.c.b16 %v943, %v942
    %v1322 = vpack.c.b16 %v945, %v944
    %v1323 = vpack.c.b16 %v947, %v946
    %v1324 = vpack.c.b16 %v949, %v948
    %v1325 = vpack.c.b16 %v951, %v950
    %v1326 = vpack.c.b16 %v953, %v952
    %v1327 = vpack.c.b16 %v955, %v954
    %v1328 = vpack.c.b16 %v957, %v956
    %v1329 = vpack.c.b16 %v959, %v958
    %v1330 = vpack.c.b16 %v961, %v960
    %v1331 = vpack.c.b16 %v963, %v962
    %v1332 = vpack.c.b16 %v965, %v964
    %v1333 = vpack.c.b16 %v967, %v966
    %v1334 = vpack.c.b16 %v969, %v968
    %v1335 = vpack.c.b16 %v971, %v970
    %v1336 = vpack.c.b16 %v973, %v972
    %v1337 = vpack.c.b16 %v975, %v974
    %v1338 = vpack.c.b16 %v977, %v976
    %v1339 = vpack.c.b16 %v979, %v978
    %v1340 = vpack.c.b16 %v981, %v980
    %v1341 = vpack.c.b16 %v983, %v982
    %v1342 = vpack.c.b16 %v985, %v984
    %v1343 = vpack.c.b16 %v987, %v986
    %v1344 = vpack.c.b16 %v989, %v988
    %v1345 = vpack.c.b16 %v991, %v990
    %v1346 = vpack.c.b16 %v993, %v992
    %v1347 = vpack.c.b16 %v995, %v994
    %v1348 = vpack.c.b16 %v997, %v996
    %v1349 = vpack.c.b16 %v999, %v998
    %v1350 = vpack.c.b16 %v1001, %v1000
    %v1351 = vpack.c.b16 %v1003, %v1002
    %v1352 = vpack.c.b16 %v1005, %v1004
    %v1353 = vpack.c.b16 %v1007, %v1006
    %v1354 = vpack.c.b16 %v1009, %v1008
    %v1355 = vpack.c.b16 %v1011, %v1010
    %v1356 = vpack.c.b16 %v1013, %v1012
    %v1357 = vpack.c.b16 %v1015, %v1014
    %v1358 = vpack.c.b16 %v1017, %v1016
    %v1359 = vpack.c.b16 %v1019, %v1018
    %v1360 = vpack.c.b16 %v1021, %v1020
    %v1361 = vpack.c.b16 %v1023, %v1022
    %v1362 = vpack.c.b16 %v1025, %v1024
    %v1363 = vpack.c.b16 %v1027, %v1026
    %v1364 = vpack.c.b16 %v1029, %v1028
    %v1365 = vpack.c.b16 %v1031, %v1030
    %v1366 = vpack.c.b16 %v1033, %v1032
    %v1367 = vpack.c.b16 %v1035, %v1034
    %v1368 = vpack.c.b16 %v1037, %v1036
    %v1369 = vpack.c.b16 %v1039, %v1038
    %v1370 = vpack.c.b16 %v1041, %v1040
    %v1371 = vpack.c.b16 %v1043, %v1042
    %v1372 = vpack.c.b16 %v1045, %v1044
    %v1373 = vpack.c.b16 %v1047, %v1046
    %v1374 = vpack.c.b16 %v1049, %v1048
    %v1375 = vpack.c.b16 %v1051, %v1050
    %v1376 = vpack.c.b16 %v1053, %v1052
    %v1377 = vpack.c.b16 %v1055, %v1054
    %v1378 = vpack.c.b16 %v1057, %v1056
    %v1379 = vpack.c.b16 %v1059, %v1058
    %v1380 = vpack.c.b16 %v1061, %v1060
    %v1381 = vpack.c.b16 %v1063, %v1062
    %v1382 = vpack.c.b16 %v1065, %v1064
    %v1383 = vpack.c.b16 %v1067, %v1066
    %v1384 = vpack.c.b16 %v1069, %v1068
    %v1385 = vpack.c.b16 %v1071, %v1070
    %v1386 = vpack.c.b16 %v1073, %v1072
    %v1387 = vpack.c.b16 %v1075, %v1074
    %v1388 = vpack.c.b16 %v1077, %v1076
    %v1389 = vpack.c.b16 %v1079, %v1078
    %v1390 = vpack.c.b16 %v1081, %v1080
    %v1391 = vpack.c.b16 %v1083, %v1082
    %v1392 = vpack.c.b16 %v1085, %v1084
    %v1393 = vpack.c.b16 %v1087, %v1086
    %v1394 = vpack.c.b16 %v1089, %v1088
    %v1395 = vpack.c.b16 %v1091, %v1090
    %v1396 = vpack.c.b16 %v1093, %v1092
    %v1397 = vpack.c.b16 %v1095, %v1094
    %v1398 = vpack.c.b16 %v1097, %v1096
    %v1399 = vpack.c.b16 %v1099, %v1098
    %v1400 = vpack.c.b16 %v1101, %v1100
    %v1401 = vpack.c.b16 %v1103, %v1102
    %v1402 = vpack.c.b16 %v1105, %v1104
    %v1403 = vpack.c.b16 %v1107, %v1106
    %v1404 = vpack.c.b16 %v1109, %v1108
    %v1405 = vpack.c.b16 %v1111, %v1110
    %v1406 = vpack.c.b16 %v1113, %v1112
    %v1407 = vpack.c.b16 %v1115, %v1114
    %v1408 = vpack.c.b16 %v1117, %v1116
    %v1409 = vpack.c.b16 %v1119, %v1118
    %v1410 = vpack.c.b16 %v1121, %v1120
    %v1411 = vpack.c.b16 %v1123, %v1122
    %v1412 = vpack.c.b16 %v1125, %v1124
    %v1413 = vpack.c.b16 %v1127, %v1126
    %v1414 = vpack.c.b16 %v1129, %v1128
    %v1415 = vpack.c.b16 %v1131, %v1130
    %v1416 = vpack.c.b16 %v1133, %v1132
    %v1417 = vpack.c.b16 %v1135, %v1134
    %v1418 = vpack.c.b16 %v1137, %v1136
    %v1419 = vpack.c.b16 %v1139, %v1138
    %v1420 = vpack.c.b16 %v1141, %v1140
    %v1421 = vpack.c.b16 %v1143, %v1142
    %v1422 = vpack.c.b16 %v1145, %v1144
    %v1423 = vpack.c.b16 %v1147, %v1146
    %v1424 = vpack.c.b16 %v1149, %v1148
    %v1425 = vpack.c.b16 %v1151, %v1150
    %v1426 = vpack.c.b16 %v1153, %v1152
    %v1427 = vpack.c.b16 %v1155, %v1154
    %v1428 = vpack.c.b16 %v1157, %v1156
    %v1429 = vpack.c.b16 %v1159, %v1158
    %v1430 = vpack.c.b16 %v1161, %v1160
    %v1431 = vpack.c.b16 %v1163, %v1162
    %v1432 = vpack.c.b16 %v1165, %v1164
    %v1433 = vpack.c.b16 %v1167, %v1166
    %v1434 = vpack.c.b16 %v1169, %v1168
    %v1435 = vpack.c.b16 %v1171, %v1170
    %v1436 = vpack.c.b16 %v1173, %v1172
    %v1437 = vpack.c.b16 %v1175, %v1174
    %v1438 = vpack.c.b16 %v1177, %v1176
    %v1439 = vpack.c.b16 %v1179, %v1178
    %v1440 = vpack.c.b16 %v1181, %v1180
    %v1441 = vpack.c.b16 %v1183, %v1182
    %v1442 = vpack.c.b16 %v1185, %v1184
    %v1443 = vpack.c.b16 %v1187, %v1186
    %v1444 = vpack.c.b16 %v1189, %v1188
    %v1445 = vpack.c.b16 %v1191, %v1190
    %v1446 = vpack.c.b16 %v1193, %v1192
    %v1447 = vpack.c.b16 %v1195, %v1194
    %v1448 = vpack.c.b16 %v1197, %v1196
    %v1449 = vpack.c.b16 %v1199, %v1198
    %v1450 = vpack.c.b16 %v1201, %v1200
    %v1451 = vpack.c.b16 %v1203, %v1202
    %v1452 = vpack.c.b16 %v1205, %v1204
    %v1453 = vpack.c.b16 %v1207, %v1206
    %v1454 = vpack.c.b16 %v1209, %v1208
    %v1455 = vpack.c.b16 %v1211, %v1210
    %v1456 = vpack.c.b16 %v1213, %v1212
    %v1457 = vpack.c.b16 %v1215, %v1214
    %v1458 = vpack.c.b16 %v1217, %v1216
    %v1459 = vpack.c.b16 %v1219, %v1218
    %v1460 = vpack.c.b16 %v1221, %v1220
    %v1461 = vpack.c.b16 %v1223, %v1222
    %v1462 = vpack.c.b16 %v1225, %v1224
    %v1463 = vpack.c.b16 %v1227, %v1226
    %v1464 = vpack.c.b16 %v1229, %v1228
    %v1465 = vpack.c.b16 %v1231, %v1230
    %v1466 = vpack.c.b16 %v1233, %v1232
    %v1467 = vpack.c.b16 %v1235, %v1234
    %v1468 = vpack.c.b16 %v1237, %v1236
    %v1469 = vpack.c.b16 %v1239, %v1238
    %v1470 = vpack.c.b16 %v1241, %v1240
    %v1471 = vpack.c.b16 %v1243, %v1242
    %v1472 = vpack.c.b16 %v1245, %v1244
    %v1473 = vpack.c.b16 %v1247, %v1246
    %v1474 = vpack.c.b16 %v1249, %v1248
    %v1475 = vpack.c.b16 %v1251, %v1250
    %v1476 = vpack.c.b16 %v1253, %v1252
    %v1477 = vpack.c.b16 %v1255, %v1254
    %v1478 = vpack.c.b16 %v1257, %v1256
    %v1479 = vpack.c.b16 %v1259, %v1258
    %v1480 = vpack.c.b16 %v1261, %v1260
    %v1481 = vpack.c.b16 %v1263, %v1262
    %v1482 = vpack.c.b16 %v1265, %v1264
    %v1483 = vpack.c.b16 %v1267, %v1266
    %v1484 = vpack.c.b16 %v1269, %v1268
    %v1485 = vpack.c.b16 %v1271, %v1270
    %v1486 = vpack.c.b16 %v1273, %v1272
    %v1487 = vpack.c.b16 %v1275, %v1274
    %v1488 = vpack.c.b16 %v1277, %v1276
    %v1489 = vpack.c.b16 %v1279, %v1278
    %v1490 = vpack.c.b16 %v1281, %v1280
    %v1491 = vpack.c.b16 %v1283, %v1282
    %v1492 = vpack.c.b16 %v1285, %v1284
    %v1493 = vpack.c.b16 %v1287, %v1286
    %v1494 = vpack.c.b16 %v1289, %v1288
    %v1495 = vpack.c.b16 %v1291, %v1290
    %v1496 = vpack.c.b16 %v1293, %v1292
    %v1497 = vpack.c.b16 %v1295, %v1294
    %v1498 = vpack.c.b16 %v1297, %v1296
    %v1499 = vpack.c.b16 %v1299, %v1298
    %v1500 = vpack.c.b16 %v1301, %v1300
    %v1501 = vpack.c.b16 %v1303, %v1302
    %v1502 = vpack.c.b16 %v1305, %v1304
    %v1503 = vpack.c.b16 %v1307, %v1306
    %v1504 = vpack.c.b16 %v1309, %v1308
    %v1505 = vpack.c.b16 %v1311, %v1310
    %v1506 = vpack.c.b16 %v1313, %v1312
    %v1507 = vpack.c.b16 %v1315, %v1314
    %1700 = vmatprep.subr.bf16.mxu0 0
    %1701 = vmatpush1.bf16.msra.mxu0 %v1323
    %1702 = vmatprep.subr.bf16.mxu0 0
    %1703 = vmatpush1.bf16.msra.mxu0 %v1322
    %1704 = vmatprep.subr.bf16.mxu0 0
    %1705 = vmatpush1.bf16.msra.mxu0 %v1321
    %1706 = vmatprep.subr.bf16.mxu0 0
    %1707 = vmatpush1.bf16.msra.mxu0 %v1320
    %1708 = vmatprep.subr.bf16.mxu0 0
    %1709 = vmatpush1.bf16.msra.mxu0 %v1319
    %1710 = vmatprep.subr.bf16.mxu0 0
    %1711 = vmatpush1.bf16.msra.mxu0 %v1318
    %1712 = vmatprep.subr.bf16.mxu0 0
    %1713 = vmatpush1.bf16.msra.mxu0 %v1317
    %1714 = vmatprep.subr.bf16.mxu0 0
    %1715 = vmatpush1.bf16.msra.mxu0 %v1316
    %1716 = vmatprep.subr.bf16.mxu0 0
    %1717 = vmatpush2.bf16.msra.mxu0 %v1331
    %1718 = vmatprep.subr.bf16.mxu0 0
    %1719 = vmatpush2.bf16.msra.mxu0 %v1330
    %1720 = vmatprep.subr.bf16.mxu0 0
    %1721 = vmatpush2.bf16.msra.mxu0 %v1329
    %1722 = vmatprep.subr.bf16.mxu0 0
    %1723 = vmatpush2.bf16.msra.mxu0 %v1328
    %1724 = vmatprep.subr.bf16.mxu0 0
    %1725 = vmatpush2.bf16.msra.mxu0 %v1327
    %1726 = vmatprep.subr.bf16.mxu0 0
    %1727 = vmatpush2.bf16.msra.mxu0 %v1326
    %1728 = vmatprep.subr.bf16.mxu0 0
    %1729 = vmatpush2.bf16.msra.mxu0 %v1325
    %1730 = vmatprep.subr.bf16.mxu0 0
    %1731 = vmatpush2.bf16.msra.mxu0 %v1324
    %1732 = vmatprep.mubr.bf16.mxu0 %v501
    %1733 = vmatmul.mubr.bf16.gmra.mxu0 %v500
    %v1734 = vpop.f32.mrf.mxu0
    %v1735 = vadd.f32 %v462, %v1734
    %v1736 = vpop.f32.mrf.mxu0
    %v1737 = vpop.f32.mrf.mxu0
    %v1738 = vpop.f32.mrf.mxu0
    %1739 = vdwg.mxu0
    %1740 = vmatprep.subr.bf16.mxu0 0
    %1741 = vmatpush1.bf16.msra.mxu0 %v1339
    %1742 = vmatprep.subr.bf16.mxu0 0
    %1743 = vmatpush1.bf16.msra.mxu0 %v1338
    %1744 = vmatprep.subr.bf16.mxu0 0
    %1745 = vmatpush1.bf16.msra.mxu0 %v1337
    %1746 = vmatprep.subr.bf16.mxu0 0
    %1747 = vmatpush1.bf16.msra.mxu0 %v1336
    %1748 = vmatprep.subr.bf16.mxu0 0
    %1749 = vmatpush1.bf16.msra.mxu0 %v1335
    %1750 = vmatprep.subr.bf16.mxu0 0
    %1751 = vmatpush1.bf16.msra.mxu0 %v1334
    %1752 = vmatprep.subr.bf16.mxu0 0
    %1753 = vmatpush1.bf16.msra.mxu0 %v1333
    %1754 = vmatprep.subr.bf16.mxu0 0
    %1755 = vmatpush1.bf16.msra.mxu0 %v1332
    %1756 = vmatprep.subr.bf16.mxu0 0
    %1757 = vmatpush2.bf16.msra.mxu0 %v1347
    %1758 = vmatprep.subr.bf16.mxu0 0
    %1759 = vmatpush2.bf16.msra.mxu0 %v1346
    %1760 = vmatprep.subr.bf16.mxu0 0
    %1761 = vmatpush2.bf16.msra.mxu0 %v1345
    %1762 = vmatprep.subr.bf16.mxu0 0
    %1763 = vmatpush2.bf16.msra.mxu0 %v1344
    %1764 = vmatprep.subr.bf16.mxu0 0
    %1765 = vmatpush2.bf16.msra.mxu0 %v1343
    %1766 = vmatprep.subr.bf16.mxu0 0
    %1767 = vmatpush2.bf16.msra.mxu0 %v1342
    %1768 = vmatprep.subr.bf16.mxu0 0
    %1769 = vmatpush2.bf16.msra.mxu0 %v1341
    %1770 = vmatprep.subr.bf16.mxu0 0
    %1771 = vmatpush2.bf16.msra.mxu0 %v1340
    %1772 = vmatprep.mubr.bf16.mxu0 %v503
    %1773 = vmatmul.mubr.bf16.gmra.mxu0 %v502
    %v1774 = vpop.f32.mrf.mxu0
    %v1775 = vadd.f32 %v1735, %v1774
    %v1776 = vpop.f32.mrf.mxu0
    %v1777 = vpop.f32.mrf.mxu0
    %v1778 = vpop.f32.mrf.mxu0
    %1779 = vdwg.mxu0
    %1780 = vmatprep.subr.bf16.mxu0 0
    %1781 = vmatpush1.bf16.msra.mxu0 %v1355
    %1782 = vmatprep.subr.bf16.mxu0 0
    %1783 = vmatpush1.bf16.msra.mxu0 %v1354
    %1784 = vmatprep.subr.bf16.mxu0 0
    %1785 = vmatpush1.bf16.msra.mxu0 %v1353
    %1786 = vmatprep.subr.bf16.mxu0 0
    %1787 = vmatpush1.bf16.msra.mxu0 %v1352
    %1788 = vmatprep.subr.bf16.mxu0 0
    %1789 = vmatpush1.bf16.msra.mxu0 %v1351
    %1790 = vmatprep.subr.bf16.mxu0 0
    %1791 = vmatpush1.bf16.msra.mxu0 %v1350
    %1792 = vmatprep.subr.bf16.mxu0 0
    %1793 = vmatpush1.bf16.msra.mxu0 %v1349
    %1794 = vmatprep.subr.bf16.mxu0 0
    %1795 = vmatpush1.bf16.msra.mxu0 %v1348
    %1796 = vmatprep.subr.bf16.mxu0 0
    %1797 = vmatpush2.bf16.msra.mxu0 %v1363
    %1798 = vmatprep.subr.bf16.mxu0 0
    %1799 = vmatpush2.bf16.msra.mxu0 %v1362
    %1800 = vmatprep.subr.bf16.mxu0 0
    %1801 = vmatpush2.bf16.msra.mxu0 %v1361
    %1802 = vmatprep.subr.bf16.mxu0 0
    %1803 = vmatpush2.bf16.msra.mxu0 %v1360
    %1804 = vmatprep.subr.bf16.mxu0 0
    %1805 = vmatpush2.bf16.msra.mxu0 %v1359
    %1806 = vmatprep.subr.bf16.mxu0 0
    %1807 = vmatpush2.bf16.msra.mxu0 %v1358
    %1808 = vmatprep.subr.bf16.mxu0 0
    %1809 = vmatpush2.bf16.msra.mxu0 %v1357
    %1810 = vmatprep.subr.bf16.mxu0 0
    %1811 = vmatpush2.bf16.msra.mxu0 %v1356
    %1812 = vmatprep.mubr.bf16.mxu0 %v505
    %1813 = vmatmul.mubr.bf16.gmra.mxu0 %v504
    %v1814 = vpop.f32.mrf.mxu0
    %v1815 = vadd.f32 %v1775, %v1814
    %v1816 = vpop.f32.mrf.mxu0
    %v1817 = vpop.f32.mrf.mxu0
    %v1818 = vpop.f32.mrf.mxu0
    %1819 = vdwg.mxu0
    %1820 = vmatprep.subr.bf16.mxu0 0
    %1821 = vmatpush1.bf16.msra.mxu0 %v1371
    %1822 = vmatprep.subr.bf16.mxu0 0
    %1823 = vmatpush1.bf16.msra.mxu0 %v1370
    %1824 = vmatprep.subr.bf16.mxu0 0
    %1825 = vmatpush1.bf16.msra.mxu0 %v1369
    %1826 = vmatprep.subr.bf16.mxu0 0
    %1827 = vmatpush1.bf16.msra.mxu0 %v1368
    %1828 = vmatprep.subr.bf16.mxu0 0
    %1829 = vmatpush1.bf16.msra.mxu0 %v1367
    %1830 = vmatprep.subr.bf16.mxu0 0
    %1831 = vmatpush1.bf16.msra.mxu0 %v1366
    %1832 = vmatprep.subr.bf16.mxu0 0
    %1833 = vmatpush1.bf16.msra.mxu0 %v1365
    %1834 = vmatprep.subr.bf16.mxu0 0
    %1835 = vmatpush1.bf16.msra.mxu0 %v1364
    %1836 = vmatprep.subr.bf16.mxu0 0
    %1837 = vmatpush2.bf16.msra.mxu0 %v1379
    %1838 = vmatprep.subr.bf16.mxu0 0
    %1839 = vmatpush2.bf16.msra.mxu0 %v1378
    %1840 = vmatprep.subr.bf16.mxu0 0
    %1841 = vmatpush2.bf16.msra.mxu0 %v1377
    %1842 = vmatprep.subr.bf16.mxu0 0
    %1843 = vmatpush2.bf16.msra.mxu0 %v1376
    %1844 = vmatprep.subr.bf16.mxu0 0
    %1845 = vmatpush2.bf16.msra.mxu0 %v1375
    %1846 = vmatprep.subr.bf16.mxu0 0
    %1847 = vmatpush2.bf16.msra.mxu0 %v1374
    %1848 = vmatprep.subr.bf16.mxu0 0
    %1849 = vmatpush2.bf16.msra.mxu0 %v1373
    %1850 = vmatprep.subr.bf16.mxu0 0
    %1851 = vmatpush2.bf16.msra.mxu0 %v1372
    %1852 = vmatprep.mubr.bf16.mxu0 %v507
    %1853 = vmatmul.mubr.bf16.gmra.mxu0 %v506
    %v1854 = vpop.f32.mrf.mxu0
    %v1855 = vadd.f32 %v1815, %v1854
    %v1856 = vpop.f32.mrf.mxu0
    %v1857 = vpop.f32.mrf.mxu0
    %v1858 = vpop.f32.mrf.mxu0
    %1859 = vdwg.mxu0
    %1860 = vmatprep.subr.bf16.mxu0 0
    %1861 = vmatpush1.bf16.msra.mxu0 %v1387
    %1862 = vmatprep.subr.bf16.mxu0 0
    %1863 = vmatpush1.bf16.msra.mxu0 %v1386
    %1864 = vmatprep.subr.bf16.mxu0 0
    %1865 = vmatpush1.bf16.msra.mxu0 %v1385
    %1866 = vmatprep.subr.bf16.mxu0 0
    %1867 = vmatpush1.bf16.msra.mxu0 %v1384
    %1868 = vmatprep.subr.bf16.mxu0 0
    %1869 = vmatpush1.bf16.msra.mxu0 %v1383
    %1870 = vmatprep.subr.bf16.mxu0 0
    %1871 = vmatpush1.bf16.msra.mxu0 %v1382
    %1872 = vmatprep.subr.bf16.mxu0 0
    %1873 = vmatpush1.bf16.msra.mxu0 %v1381
    %1874 = vmatprep.subr.bf16.mxu0 0
    %1875 = vmatpush1.bf16.msra.mxu0 %v1380
    %1876 = vmatprep.subr.bf16.mxu0 0
    %1877 = vmatpush2.bf16.msra.mxu0 %v1395
    %1878 = vmatprep.subr.bf16.mxu0 0
    %1879 = vmatpush2.bf16.msra.mxu0 %v1394
    %1880 = vmatprep.subr.bf16.mxu0 0
    %1881 = vmatpush2.bf16.msra.mxu0 %v1393
    %1882 = vmatprep.subr.bf16.mxu0 0
    %1883 = vmatpush2.bf16.msra.mxu0 %v1392
    %1884 = vmatprep.subr.bf16.mxu0 0
    %1885 = vmatpush2.bf16.msra.mxu0 %v1391
    %1886 = vmatprep.subr.bf16.mxu0 0
    %1887 = vmatpush2.bf16.msra.mxu0 %v1390
    %1888 = vmatprep.subr.bf16.mxu0 0
    %1889 = vmatpush2.bf16.msra.mxu0 %v1389
    %1890 = vmatprep.subr.bf16.mxu0 0
    %1891 = vmatpush2.bf16.msra.mxu0 %v1388
    %1892 = vmatprep.mubr.bf16.mxu0 %v509
    %1893 = vmatmul.mubr.bf16.gmra.mxu0 %v508
    %v1894 = vpop.f32.mrf.mxu0
    %v1895 = vadd.f32 %v1855, %v1894
    %v1896 = vpop.f32.mrf.mxu0
    %v1897 = vpop.f32.mrf.mxu0
    %v1898 = vpop.f32.mrf.mxu0
    %1899 = vdwg.mxu0
    %1900 = vmatprep.subr.bf16.mxu0 0
    %1901 = vmatpush1.bf16.msra.mxu0 %v1403
    %1902 = vmatprep.subr.bf16.mxu0 0
    %1903 = vmatpush1.bf16.msra.mxu0 %v1402
    %1904 = vmatprep.subr.bf16.mxu0 0
    %1905 = vmatpush1.bf16.msra.mxu0 %v1401
    %1906 = vmatprep.subr.bf16.mxu0 0
    %1907 = vmatpush1.bf16.msra.mxu0 %v1400
    %1908 = vmatprep.subr.bf16.mxu0 0
    %1909 = vmatpush1.bf16.msra.mxu0 %v1399
    %1910 = vmatprep.subr.bf16.mxu0 0
    %1911 = vmatpush1.bf16.msra.mxu0 %v1398
    %1912 = vmatprep.subr.bf16.mxu0 0
    %1913 = vmatpush1.bf16.msra.mxu0 %v1397
    %1914 = vmatprep.subr.bf16.mxu0 0
    %1915 = vmatpush1.bf16.msra.mxu0 %v1396
    %1916 = vmatprep.subr.bf16.mxu0 0
    %1917 = vmatpush2.bf16.msra.mxu0 %v1411
    %1918 = vmatprep.subr.bf16.mxu0 0
    %1919 = vmatpush2.bf16.msra.mxu0 %v1410
    %1920 = vmatprep.subr.bf16.mxu0 0
    %1921 = vmatpush2.bf16.msra.mxu0 %v1409
    %1922 = vmatprep.subr.bf16.mxu0 0
    %1923 = vmatpush2.bf16.msra.mxu0 %v1408
    %1924 = vmatprep.subr.bf16.mxu0 0
    %1925 = vmatpush2.bf16.msra.mxu0 %v1407
    %1926 = vmatprep.subr.bf16.mxu0 0
    %1927 = vmatpush2.bf16.msra.mxu0 %v1406
    %1928 = vmatprep.subr.bf16.mxu0 0
    %1929 = vmatpush2.bf16.msra.mxu0 %v1405
    %1930 = vmatprep.subr.bf16.mxu0 0
    %1931 = vmatpush2.bf16.msra.mxu0 %v1404
    %1932 = vmatprep.mubr.bf16.mxu0 %v511
    %1933 = vmatmul.mubr.bf16.gmra.mxu0 %v510
    %v1934 = vpop.f32.mrf.mxu0
    %v1935 = vadd.f32 %v1895, %v1934
    %v1936 = vpop.f32.mrf.mxu0
    %v1937 = vpop.f32.mrf.mxu0
    %v1938 = vpop.f32.mrf.mxu0
    %1939 = vdwg.mxu0
    %1940 = vmatprep.subr.bf16.mxu0 0
    %1941 = vmatpush1.bf16.msra.mxu0 %v1419
    %1942 = vmatprep.subr.bf16.mxu0 0
    %1943 = vmatpush1.bf16.msra.mxu0 %v1418
    %1944 = vmatprep.subr.bf16.mxu0 0
    %1945 = vmatpush1.bf16.msra.mxu0 %v1417
    %1946 = vmatprep.subr.bf16.mxu0 0
    %1947 = vmatpush1.bf16.msra.mxu0 %v1416
    %1948 = vmatprep.subr.bf16.mxu0 0
    %1949 = vmatpush1.bf16.msra.mxu0 %v1415
    %1950 = vmatprep.subr.bf16.mxu0 0
    %1951 = vmatpush1.bf16.msra.mxu0 %v1414
    %1952 = vmatprep.subr.bf16.mxu0 0
    %1953 = vmatpush1.bf16.msra.mxu0 %v1413
    %1954 = vmatprep.subr.bf16.mxu0 0
    %1955 = vmatpush1.bf16.msra.mxu0 %v1412
    %1956 = vmatprep.subr.bf16.mxu0 0
    %1957 = vmatpush2.bf16.msra.mxu0 %v1427
    %1958 = vmatprep.subr.bf16.mxu0 0
    %1959 = vmatpush2.bf16.msra.mxu0 %v1426
    %1960 = vmatprep.subr.bf16.mxu0 0
    %1961 = vmatpush2.bf16.msra.mxu0 %v1425
    %1962 = vmatprep.subr.bf16.mxu0 0
    %1963 = vmatpush2.bf16.msra.mxu0 %v1424
    %1964 = vmatprep.subr.bf16.mxu0 0
    %1965 = vmatpush2.bf16.msra.mxu0 %v1423
    %1966 = vmatprep.subr.bf16.mxu0 0
    %1967 = vmatpush2.bf16.msra.mxu0 %v1422
    %1968 = vmatprep.subr.bf16.mxu0 0
    %1969 = vmatpush2.bf16.msra.mxu0 %v1421
    %1970 = vmatprep.subr.bf16.mxu0 0
    %1971 = vmatpush2.bf16.msra.mxu0 %v1420
    %1972 = vmatprep.mubr.bf16.mxu0 %v513
    %1973 = vmatmul.mubr.bf16.gmra.mxu0 %v512
    %v1974 = vpop.f32.mrf.mxu0
    %v1975 = vadd.f32 %v1935, %v1974
    %v1976 = vpop.f32.mrf.mxu0
    %v1977 = vpop.f32.mrf.mxu0
    %v1978 = vpop.f32.mrf.mxu0
    %1979 = vdwg.mxu0
    %1980 = vmatprep.subr.bf16.mxu0 0
    %1981 = vmatpush1.bf16.msra.mxu0 %v1435
    %1982 = vmatprep.subr.bf16.mxu0 0
    %1983 = vmatpush1.bf16.msra.mxu0 %v1434
    %1984 = vmatprep.subr.bf16.mxu0 0
    %1985 = vmatpush1.bf16.msra.mxu0 %v1433
    %1986 = vmatprep.subr.bf16.mxu0 0
    %1987 = vmatpush1.bf16.msra.mxu0 %v1432
    %1988 = vmatprep.subr.bf16.mxu0 0
    %1989 = vmatpush1.bf16.msra.mxu0 %v1431
    %1990 = vmatprep.subr.bf16.mxu0 0
    %1991 = vmatpush1.bf16.msra.mxu0 %v1430
    %1992 = vmatprep.subr.bf16.mxu0 0
    %1993 = vmatpush1.bf16.msra.mxu0 %v1429
    %1994 = vmatprep.subr.bf16.mxu0 0
    %1995 = vmatpush1.bf16.msra.mxu0 %v1428
    %1996 = vmatprep.subr.bf16.mxu0 0
    %1997 = vmatpush2.bf16.msra.mxu0 %v1443
    %1998 = vmatprep.subr.bf16.mxu0 0
    %1999 = vmatpush2.bf16.msra.mxu0 %v1442
    %2000 = vmatprep.subr.bf16.mxu0 0
    %2001 = vmatpush2.bf16.msra.mxu0 %v1441
    %2002 = vmatprep.subr.bf16.mxu0 0
    %2003 = vmatpush2.bf16.msra.mxu0 %v1440
    %2004 = vmatprep.subr.bf16.mxu0 0
    %2005 = vmatpush2.bf16.msra.mxu0 %v1439
    %2006 = vmatprep.subr.bf16.mxu0 0
    %2007 = vmatpush2.bf16.msra.mxu0 %v1438
    %2008 = vmatprep.subr.bf16.mxu0 0
    %2009 = vmatpush2.bf16.msra.mxu0 %v1437
    %2010 = vmatprep.subr.bf16.mxu0 0
    %2011 = vmatpush2.bf16.msra.mxu0 %v1436
    %2012 = vmatprep.mubr.bf16.mxu0 %v515
    %2013 = vmatmul.mubr.bf16.gmra.mxu0 %v514
    %v2014 = vpop.f32.mrf.mxu0
    %v2015 = vadd.f32 %v1975, %v2014
    %v2016 = vpop.f32.mrf.mxu0
    %v2017 = vpop.f32.mrf.mxu0
    %v2018 = vpop.f32.mrf.mxu0
    %2019 = vdwg.mxu0
    %2020 = vmatprep.subr.bf16.mxu0 0
    %2021 = vmatpush1.bf16.msra.mxu0 %v1451
    %2022 = vmatprep.subr.bf16.mxu0 0
    %2023 = vmatpush1.bf16.msra.mxu0 %v1450
    %2024 = vmatprep.subr.bf16.mxu0 0
    %2025 = vmatpush1.bf16.msra.mxu0 %v1449
    %2026 = vmatprep.subr.bf16.mxu0 0
    %2027 = vmatpush1.bf16.msra.mxu0 %v1448
    %2028 = vmatprep.subr.bf16.mxu0 0
    %2029 = vmatpush1.bf16.msra.mxu0 %v1447
    %2030 = vmatprep.subr.bf16.mxu0 0
    %2031 = vmatpush1.bf16.msra.mxu0 %v1446
    %2032 = vmatprep.subr.bf16.mxu0 0
    %2033 = vmatpush1.bf16.msra.mxu0 %v1445
    %2034 = vmatprep.subr.bf16.mxu0 0
    %2035 = vmatpush1.bf16.msra.mxu0 %v1444
    %2036 = vmatprep.subr.bf16.mxu0 0
    %2037 = vmatpush2.bf16.msra.mxu0 %v1459
    %2038 = vmatprep.subr.bf16.mxu0 0
    %2039 = vmatpush2.bf16.msra.mxu0 %v1458
    %2040 = vmatprep.subr.bf16.mxu0 0
    %2041 = vmatpush2.bf16.msra.mxu0 %v1457
    %2042 = vmatprep.subr.bf16.mxu0 0
    %2043 = vmatpush2.bf16.msra.mxu0 %v1456
    %2044 = vmatprep.subr.bf16.mxu0 0
    %2045 = vmatpush2.bf16.msra.mxu0 %v1455
    %2046 = vmatprep.subr.bf16.mxu0 0
    %2047 = vmatpush2.bf16.msra.mxu0 %v1454
    %2048 = vmatprep.subr.bf16.mxu0 0
    %2049 = vmatpush2.bf16.msra.mxu0 %v1453
    %2050 = vmatprep.subr.bf16.mxu0 0
    %2051 = vmatpush2.bf16.msra.mxu0 %v1452
    %2052 = vmatprep.mubr.bf16.mxu0 %v517
    %2053 = vmatmul.mubr.bf16.gmra.mxu0 %v516
    %v2054 = vpop.f32.mrf.mxu0
    %v2055 = vadd.f32 %v2015, %v2054
    %v2056 = vpop.f32.mrf.mxu0
    %v2057 = vpop.f32.mrf.mxu0
    %v2058 = vpop.f32.mrf.mxu0
    %2059 = vdwg.mxu0
    %2060 = vmatprep.subr.bf16.mxu0 0
    %2061 = vmatpush1.bf16.msra.mxu0 %v1467
    %2062 = vmatprep.subr.bf16.mxu0 0
    %2063 = vmatpush1.bf16.msra.mxu0 %v1466
    %2064 = vmatprep.subr.bf16.mxu0 0
    %2065 = vmatpush1.bf16.msra.mxu0 %v1465
    %2066 = vmatprep.subr.bf16.mxu0 0
    %2067 = vmatpush1.bf16.msra.mxu0 %v1464
    %2068 = vmatprep.subr.bf16.mxu0 0
    %2069 = vmatpush1.bf16.msra.mxu0 %v1463
    %2070 = vmatprep.subr.bf16.mxu0 0
    %2071 = vmatpush1.bf16.msra.mxu0 %v1462
    %2072 = vmatprep.subr.bf16.mxu0 0
    %2073 = vmatpush1.bf16.msra.mxu0 %v1461
    %2074 = vmatprep.subr.bf16.mxu0 0
    %2075 = vmatpush1.bf16.msra.mxu0 %v1460
    %2076 = vmatprep.subr.bf16.mxu0 0
    %2077 = vmatpush2.bf16.msra.mxu0 %v1475
    %2078 = vmatprep.subr.bf16.mxu0 0
    %2079 = vmatpush2.bf16.msra.mxu0 %v1474
    %2080 = vmatprep.subr.bf16.mxu0 0
    %2081 = vmatpush2.bf16.msra.mxu0 %v1473
    %2082 = vmatprep.subr.bf16.mxu0 0
    %2083 = vmatpush2.bf16.msra.mxu0 %v1472
    %2084 = vmatprep.subr.bf16.mxu0 0
    %2085 = vmatpush2.bf16.msra.mxu0 %v1471
    %2086 = vmatprep.subr.bf16.mxu0 0
    %2087 = vmatpush2.bf16.msra.mxu0 %v1470
    %2088 = vmatprep.subr.bf16.mxu0 0
    %2089 = vmatpush2.bf16.msra.mxu0 %v1469
    %2090 = vmatprep.subr.bf16.mxu0 0
    %2091 = vmatpush2.bf16.msra.mxu0 %v1468
    %2092 = vmatprep.mubr.bf16.mxu0 %v519
    %2093 = vmatmul.mubr.bf16.gmra.mxu0 %v518
    %v2094 = vpop.f32.mrf.mxu0
    %v2095 = vadd.f32 %v2055, %v2094
    %v2096 = vpop.f32.mrf.mxu0
    %v2097 = vpop.f32.mrf.mxu0
    %v2098 = vpop.f32.mrf.mxu0
    %2099 = vdwg.mxu0
    %2100 = vmatprep.subr.bf16.mxu0 0
    %2101 = vmatpush1.bf16.msra.mxu0 %v1483
    %2102 = vmatprep.subr.bf16.mxu0 0
    %2103 = vmatpush1.bf16.msra.mxu0 %v1482
    %2104 = vmatprep.subr.bf16.mxu0 0
    %2105 = vmatpush1.bf16.msra.mxu0 %v1481
    %2106 = vmatprep.subr.bf16.mxu0 0
    %2107 = vmatpush1.bf16.msra.mxu0 %v1480
    %2108 = vmatprep.subr.bf16.mxu0 0
    %2109 = vmatpush1.bf16.msra.mxu0 %v1479
    %2110 = vmatprep.subr.bf16.mxu0 0
    %2111 = vmatpush1.bf16.msra.mxu0 %v1478
    %2112 = vmatprep.subr.bf16.mxu0 0
    %2113 = vmatpush1.bf16.msra.mxu0 %v1477
    %2114 = vmatprep.subr.bf16.mxu0 0
    %2115 = vmatpush1.bf16.msra.mxu0 %v1476
    %2116 = vmatprep.subr.bf16.mxu0 0
    %2117 = vmatpush2.bf16.msra.mxu0 %v1491
    %2118 = vmatprep.subr.bf16.mxu0 0
    %2119 = vmatpush2.bf16.msra.mxu0 %v1490
    %2120 = vmatprep.subr.bf16.mxu0 0
    %2121 = vmatpush2.bf16.msra.mxu0 %v1489
    %2122 = vmatprep.subr.bf16.mxu0 0
    %2123 = vmatpush2.bf16.msra.mxu0 %v1488
    %2124 = vmatprep.subr.bf16.mxu0 0
    %2125 = vmatpush2.bf16.msra.mxu0 %v1487
    %2126 = vmatprep.subr.bf16.mxu0 0
    %2127 = vmatpush2.bf16.msra.mxu0 %v1486
    %2128 = vmatprep.subr.bf16.mxu0 0
    %2129 = vmatpush2.bf16.msra.mxu0 %v1485
    %2130 = vmatprep.subr.bf16.mxu0 0
    %2131 = vmatpush2.bf16.msra.mxu0 %v1484
    %2132 = vmatprep.mubr.bf16.mxu0 %v521
    %2133 = vmatmul.mubr.bf16.gmra.mxu0 %v520
    %v2134 = vpop.f32.mrf.mxu0
    %v2135 = vadd.f32 %v2095, %v2134
    %v2136 = vpop.f32.mrf.mxu0
    %v2137 = vpop.f32.mrf.mxu0
    %v2138 = vpop.f32.mrf.mxu0
    %2139 = vdwg.mxu0
    %2140 = vmatprep.subr.bf16.mxu0 0
    %2141 = vmatpush1.bf16.msra.mxu0 %v1499
    %2142 = vmatprep.subr.bf16.mxu0 0
    %2143 = vmatpush1.bf16.msra.mxu0 %v1498
    %2144 = vmatprep.subr.bf16.mxu0 0
    %2145 = vmatpush1.bf16.msra.mxu0 %v1497
    %2146 = vmatprep.subr.bf16.mxu0 0
    %2147 = vmatpush1.bf16.msra.mxu0 %v1496
    %2148 = vmatprep.subr.bf16.mxu0 0
    %2149 = vmatpush1.bf16.msra.mxu0 %v1495
    %2150 = vmatprep.subr.bf16.mxu0 0
    %2151 = vmatpush1.bf16.msra.mxu0 %v1494
    %2152 = vmatprep.subr.bf16.mxu0 0
    %2153 = vmatpush1.bf16.msra.mxu0 %v1493
    %2154 = vmatprep.subr.bf16.mxu0 0
    %2155 = vmatpush1.bf16.msra.mxu0 %v1492
    %2156 = vmatprep.subr.bf16.mxu0 0
    %2157 = vmatpush2.bf16.msra.mxu0 %v1507
    %2158 = vmatprep.subr.bf16.mxu0 0
    %2159 = vmatpush2.bf16.msra.mxu0 %v1506
    %2160 = vmatprep.subr.bf16.mxu0 0
    %2161 = vmatpush2.bf16.msra.mxu0 %v1505
    %2162 = vmatprep.subr.bf16.mxu0 0
    %2163 = vmatpush2.bf16.msra.mxu0 %v1504
    %2164 = vmatprep.subr.bf16.mxu0 0
    %2165 = vmatpush2.bf16.msra.mxu0 %v1503
    %2166 = vmatprep.subr.bf16.mxu0 0
    %2167 = vmatpush2.bf16.msra.mxu0 %v1502
    %2168 = vmatprep.subr.bf16.mxu0 0
    %2169 = vmatpush2.bf16.msra.mxu0 %v1501
    %2170 = vmatprep.subr.bf16.mxu0 0
    %2171 = vmatpush2.bf16.msra.mxu0 %v1500
    %2172 = vmatprep.mubr.bf16.mxu0 %v523
    %2173 = vmatmul.mubr.bf16.gmra.mxu0 %v522
    %v2174 = vpop.f32.mrf.mxu0
    %v2175 = vadd.f32 %v2135, %v2174
    %v2176 = vpop.f32.mrf.mxu0
    %v2177 = vpop.f32.mrf.mxu0
    %v2178 = vpop.f32.mrf.mxu0
    %2179 = vdwg.mxu0
    %v2180 = vmax.f32 %v2175, 0.0
    %v2181 = vld [vmem:[#allocation7] sm:$0xff]
    %v2182 = vld [vmem:[#allocation7 + $0x8] sm:$0xff]
    %v2183 = vld [vmem:[#allocation7 + $0x10] sm:$0xff]
    %v2184 = vld [vmem:[#allocation7 + $0x18] sm:$0xff]
    %v2185 = vld [vmem:[#allocation7 + $0x20] sm:$0xff]
    %v2186 = vld [vmem:[#allocation7 + $0x28] sm:$0xff]
    %v2187 = vld [vmem:[#allocation7 + $0x30] sm:$0xff]
    %v2188 = vld [vmem:[#allocation7 + $0x38] sm:$0xff]
    %v2189 = vld [vmem:[#allocation7 + $0x40] sm:$0xff]
    %v2190 = vld [vmem:[#allocation7 + $0x48] sm:$0xff]
    %v2191 = vld [vmem:[#allocation7 + $0x50] sm:$0xff]
    %v2192 = vld [vmem:[#allocation7 + $0x58] sm:$0xff]
    %v2193 = vld [vmem:[#allocation7 + $0x60] sm:$0xff]
    %v2194 = vld [vmem:[#allocation7 + $0x68] sm:$0xff]
    %v2195 = vld [vmem:[#allocation7 + $0x70] sm:$0xff]
    %v2196 = vld [vmem:[#allocation7 + $0x78] sm:$0xff]
    %v2197 = vld [vmem:[%s4] sm:$0x1]
    %v2199 = vlaneseq
    %v2200 = vshrl.u32 %v2199, 7
    %v2201 = vsub.s32 0, %v2200
    %v2202 = vrot.slane %v2197, %v2201
    %2204 = vmatprep.subr.mxu0 0.0
    %2205 = vmatpush1.msra.mxu0 %v2196
    %2206 = vmatprep.subr.mxu0 0.0
    %2207 = vmatpush1.msra.mxu0 %v2195
    %2208 = vmatprep.subr.mxu0 0.0
    %2209 = vmatpush1.msra.mxu0 %v2194
    %2210 = vmatprep.subr.mxu0 0.0
    %2211 = vmatpush1.msra.mxu0 %v2193
    %2212 = vmatprep.subr.mxu0 0.0
    %2213 = vmatpush1.msra.mxu0 %v2192
    %2214 = vmatprep.subr.mxu0 0.0
    %2215 = vmatpush1.msra.mxu0 %v2191
    %2216 = vmatprep.subr.mxu0 0.0
    %2217 = vmatpush1.msra.mxu0 %v2190
    %2218 = vmatprep.subr.mxu0 0.0
    %2219 = vmatpush1.msra.mxu0 %v2189
    %2220 = vmatprep.subr.mxu0 0.0
    %2221 = vmatpush1.msra.mxu0 %v2188
    %2222 = vmatprep.subr.mxu0 0.0
    %2223 = vmatpush1.msra.mxu0 %v2187
    %2224 = vmatprep.subr.mxu0 0.0
    %2225 = vmatpush1.msra.mxu0 %v2186
    %2226 = vmatprep.subr.mxu0 0.0
    %2227 = vmatpush1.msra.mxu0 %v2185
    %2228 = vmatprep.subr.mxu0 0.0
    %2229 = vmatpush1.msra.mxu0 %v2184
    %2230 = vmatprep.subr.mxu0 0.0
    %2231 = vmatpush1.msra.mxu0 %v2183
    %2232 = vmatprep.subr.mxu0 0.0
    %2233 = vmatpush1.msra.mxu0 %v2182
    %2234 = vmatprep.subr.mxu0 0.0
    %2235 = vmatpush1.msra.mxu0 %v2181
    %2236 = vmatprep.subr.mxu0 0.0
    %2237 = vmatpush2.msra.mxu0 0.0
    %2238 = vmatprep.subr.mxu0 0.0
    %2239 = vmatpush2.msra.mxu0 0.0
    %2240 = vmatprep.subr.mxu0 0.0
    %2241 = vmatpush2.msra.mxu0 0.0
    %2242 = vmatprep.subr.mxu0 0.0
    %2243 = vmatpush2.msra.mxu0 0.0
    %2244 = vmatprep.subr.mxu0 0.0
    %2245 = vmatpush2.msra.mxu0 0.0
    %2246 = vmatprep.subr.mxu0 0.0
    %2247 = vmatpush2.msra.mxu0 0.0
    %2248 = vmatprep.subr.mxu0 0.0
    %2249 = vmatpush2.msra.mxu0 0.0
    %2250 = vmatprep.subr.mxu0 0.0
    %2251 = vmatpush2.msra.mxu0 0.0
    %2252 = vmatprep.subr.mxu0 0.0
    %2253 = vmatpush2.msra.mxu0 0.0
    %2254 = vmatprep.subr.mxu0 0.0
    %2255 = vmatpush2.msra.mxu0 0.0
    %2256 = vmatprep.subr.mxu0 0.0
    %2257 = vmatpush2.msra.mxu0 0.0
    %2258 = vmatprep.subr.mxu0 0.0
    %2259 = vmatpush2.msra.mxu0 0.0
    %2260 = vmatprep.subr.mxu0 0.0
    %2261 = vmatpush2.msra.mxu0 0.0
    %2262 = vmatprep.subr.mxu0 0.0
    %2263 = vmatpush2.msra.mxu0 0.0
    %2264 = vmatprep.subr.mxu0 0.0
    %2265 = vmatpush2.msra.mxu0 0.0
    %2266 = vmatprep.subr.mxu0 0.0
    %2267 = vmatpush2.msra.mxu0 0.0
    %2268 = vmatprep.mubr.f32.mxu0 0.0
    %2269 = vmatmul.mubr.f32.gmra.mxu0 %v2180
    %v2270 = vpop.f32.mrf.mxu0
    %v2271 = vadd.f32 %v2202, %v2270
    %v2272 = vpop.f32.mrf.mxu0
    %2273 = vdwg.mxu0
    %v2274 = vlaneseq
    %v2275 = vand.u32 %v2274, 127
    %vm2276 = vcmp.lt.s32.totalorder %v2275, 10
    %v2277 = vsel %vm2276, %v2271, -1e+30
    %2278 = vmax.xlane.f32.xlu0 %v2277
    %v2279 = vpop.xlane.xlu0 %2278
    %v2280 = vsub.f32 %v2277, %v2279
    %v2281 = vmul.f32 %v2280, 1.442695
    %v2282 = vpow.pop %v2281
    %2283 = vadd.xlane.f32.xlu0 %v2282
    %v2284 = vpop.xlane.xlu0 %2283
    %v2285 = vlog2.pop %v2284
    %v2286 = vmul.f32 %v2285, 0.6931472
    %v2287 = vsub.f32 %v2280, %v2286
    %2288 = vst [vmem:[#allocation8] sm:$0xff] %v2287
    // Predicated region
    $region34: #{tpu_custom_call.1} parent=1 // pred_check
      _
    $region35: #{tpu_custom_call.1} parent=1 // pred_check_branch
      %2290 = sbr.rel (0) target = $region37
    $region36: #{tpu_custom_call.1} parent=1 // pred_region
      %s2292 = ssub.s32 128, 128
      %2293 = vsyncadd [#allocation4], %s2292
      %s2295 = sshll.u32 [#allocation8], 4
      %s2296 = int_to_ptr.vmem [resolvable:$true] %s2295
      %2298 = dma.vmem_to_hbm [thread:$0]  %s2296, 128, %s5, [#allocation4]
    $region37: #{tpu_custom_call.1} parent=1 // pred_fallthru
      _
    // Predicated region
    $region38: #{tpu_custom_call.1} parent=1 // pred_check
      _
    $region39: #{tpu_custom_call.1} parent=1 // pred_check_branch
      %2300 = sbr.rel (0) target = $region41
    $region40: #{tpu_custom_call.1} parent=1 // pred_region
      %2301 = dma.done [#allocation4], 128
    $region41: #{tpu_custom_call.1} parent=1 // pred_fallthru
      _
    %2302 = vsyncpa [#allocation3], 1
    %2303 = vsyncpa [#allocation6], 1
    %2304 = vsyncpa [#allocation4], 1

</llo_original>
